<compile_context>
chip_gen: v7x
topology: tpu7x:2x2x1
jax: 0.10.0
libtpu: 0.0.40
codegen_flags: <defaults>
</compile_context>

<pallas_src>
import jax
import jax.numpy as jnp
from jax import lax
from jax.experimental import pallas as pl
from jax.experimental.pallas import tpu as pltpu

EPS = 1e-6


def layernorm_kernel(x_ref, w_ref, b_ref, o_ref):
    # x_ref: (TILE_N, C) block in VMEM; w_ref/b_ref: (1, C) resident f32 blocks.
    x = x_ref[...].astype(jnp.float32)
    inv_c = 1.0 / x.shape[-1]
    # Single pass over x: two independent XLU reductions.
    s1 = jnp.sum(x, axis=-1, keepdims=True)
    s2 = jnp.sum(x * x, axis=-1, keepdims=True)
    mean = s1 * inv_c
    var = jnp.maximum(s2 * inv_c - mean * mean, 0.0)
    inv = lax.rsqrt(var + EPS)  # EUP slot, effectively free
    y = (x - mean) * inv * w_ref[...] + b_ref[...]
    o_ref[...] = y.astype(o_ref.dtype)


def layernorm_lastdim(x, weight, bias, *, tile_n=None):
    """LayerNorm over the last dim of x (any leading shape), eps=1e-6.

    Matches torch.nn.LayerNorm((C,), eps=1e-6, elementwise_affine=True).
    """
    orig_shape = x.shape
    C = orig_shape[-1]
    N = 1
    for d in orig_shape[:-1]:
        N *= d

    x2d = x.reshape(N, C)
    # Pre-cast affine params to f32 once here (tiny arrays) instead of every
    # grid step inside the kernel.
    w2d = weight.astype(jnp.float32).reshape(1, C)
    b2d = bias.astype(jnp.float32).reshape(1, C)

    itemsize = jnp.dtype(x.dtype).itemsize
    # Sublane pack granularity: f32 -> 8, bf16 -> 16, int8/fp8 -> 32.
    pack = max(8, 32 // itemsize)
    if tile_n is None:
        # ~3 MB f32 tiles; proportionally more rows for narrower dtypes.
        tile_n = {4: 1024, 2: 2048, 1: 4096}.get(itemsize, 1024)

    if N <= tile_n:
        # Single step; block == full array dims, so exempt from the (8,128)
        # rule.  No padding, no slicing.
        tile_rows = N
        grid = (1,)
    else:
        # Multi-step; final block may be ragged — Pallas masks OOB output
        # stores and rows are independent, so no padded copy is needed.
        tile_rows = max(pack, (tile_n // pack) * pack)
        grid = (pl.cdiv(N, tile_rows),)

    out = pl.pallas_call(
        layernorm_kernel,
        out_shape=jax.ShapeDtypeStruct((N, C), x.dtype),
        grid=grid,
        in_specs=[
            pl.BlockSpec((tile_rows, C), lambda i: (i, 0)),
            pl.BlockSpec((1, C), lambda i: (0, 0)),
            pl.BlockSpec((1, C), lambda i: (0, 0)),
        ],
        out_specs=pl.BlockSpec((tile_rows, C), lambda i: (i, 0)),
        compiler_params=pltpu.CompilerParams(
            dimension_semantics=("parallel",),
        ),
    )(x2d, w2d, b2d)

    return out.reshape(orig_shape)


if __name__ == "__main__":
    key = jax.random.PRNGKey(0)
    kx, kw, kb = jax.random.split(key, 3)

    # Shapes as implied by the module: x285 = randn([1, 14, 14, 768])
    x = jax.random.normal(kx, (1, 14, 14, 768), dtype=jnp.float32)
    # PyTorch LayerNorm default init is ones/zeros; perturb slightly but
    # deterministically so the affine path is exercised.
    weight = jnp.ones((768,), jnp.float32) + 0.01 * jax.random.normal(
        kw, (768,), jnp.float32
    )
    bias = 0.01 * jax.random.normal(kb, (768,), jnp.float32)

    # Reference (plain JAX, matches torch.nn.LayerNorm semantics).
    mean = jnp.mean(x, axis=-1, keepdims=True)
    var = jnp.mean((x - mean) ** 2, axis=-1, keepdims=True)
    y_ref = (x - mean) * lax.rsqrt(var + EPS) * weight + bias

    # Path 1: module's real shape -> single full-array block, grid=(1,).
    y = layernorm_lastdim(x, weight, bias)
    jax.block_until_ready(y)
    assert jnp.allclose(y, y_ref, atol=1e-4, rtol=1e-4), "mismatch (full-block path)"

    # Path 2: force the tiled/ragged path (N=196 with 64-row tiles -> 4-row
    # ragged final block) to verify masked OOB stores don't leak garbage.
    y2 = layernorm_lastdim(x, weight, bias, tile_n=64)
    jax.block_until_ready(y2)
    assert jnp.allclose(y2, y_ref, atol=1e-4, rtol=1e-4), "mismatch (ragged path)"

    print("KERNEL_OK")
</pallas_src>

<mosaic_0001>
module attributes {stable_mosaic.version = 11 : i64} {
  func.func @layernorm_kernel(%arg0: i32, %arg1: memref<196x768xf32, #tpu.memory_space<vmem>>, %arg2: memref<1x768xf32, #tpu.memory_space<vmem>>, %arg3: memref<1x768xf32, #tpu.memory_space<vmem>>, %arg4: memref<196x768xf32, #tpu.memory_space<vmem>>) attributes {dimension_semantics = [#tpu.dimension_semantics<parallel>], iteration_bounds = array<i64: 1>, scalar_prefetch = 0 : i64, scratch_operands = 0 : i64, tpu.core_type = #tpu.core_type<tc>, window_params = [{transform_indices = @transform_0, window_bounds = array<i64: 196, 768>}, {pipeline_mode = #tpu.pipeline_mode<synchronous>, transform_indices = @transform_1, window_bounds = array<i64: 1, 768>}, {pipeline_mode = #tpu.pipeline_mode<synchronous>, transform_indices = @transform_2, window_bounds = array<i64: 1, 768>}, {transform_indices = @transform_3, window_bounds = array<i64: 196, 768>}]} {
    %c0 = arith.constant 0 : index
    %c0_0 = arith.constant 0 : index
    %0 = vector.load %arg1[%c0, %c0_0] : memref<196x768xf32, #tpu.memory_space<vmem>>, vector<196x768xf32>
    %cst = arith.constant dense<0.000000e+00> : vector<196xf32>
    %1 = vector.multi_reduction <add>, %0, %cst [1] : vector<196x768xf32> to vector<196xf32>
    %2 = vector.shape_cast %1 : vector<196xf32> to vector<196x1xf32>
    %3 = arith.mulf %0, %0 : vector<196x768xf32>
    %cst_1 = arith.constant dense<0.000000e+00> : vector<196xf32>
    %4 = vector.multi_reduction <add>, %3, %cst_1 [1] : vector<196x768xf32> to vector<196xf32>
    %5 = vector.shape_cast %4 : vector<196xf32> to vector<196x1xf32>
    %cst_2 = arith.constant 0.00130208337 : f32
    %6 = vector.broadcast %cst_2 : f32 to vector<196x1xf32>
    %7 = arith.mulf %2, %6 : vector<196x1xf32>
    %cst_3 = arith.constant 0.00130208337 : f32
    %8 = vector.broadcast %cst_3 : f32 to vector<196x1xf32>
    %9 = arith.mulf %5, %8 : vector<196x1xf32>
    %10 = arith.mulf %7, %7 : vector<196x1xf32>
    %11 = arith.subf %9, %10 : vector<196x1xf32>
    %cst_4 = arith.constant 0.000000e+00 : f32
    %12 = vector.broadcast %cst_4 : f32 to vector<196x1xf32>
    %13 = arith.maximumf %11, %12 : vector<196x1xf32>
    %cst_5 = arith.constant 9.99999997E-7 : f32
    %14 = vector.broadcast %cst_5 : f32 to vector<196x1xf32>
    %15 = arith.addf %13, %14 : vector<196x1xf32>
    %16 = math.rsqrt %15 : vector<196x1xf32>
    %17 = vector.broadcast %7 : vector<196x1xf32> to vector<196x768xf32>
    %18 = arith.subf %0, %17 : vector<196x768xf32>
    %19 = vector.broadcast %16 : vector<196x1xf32> to vector<196x768xf32>
    %20 = arith.mulf %18, %19 : vector<196x768xf32>
    %c0_6 = arith.constant 0 : index
    %c0_7 = arith.constant 0 : index
    %21 = vector.load %arg2[%c0_6, %c0_7] : memref<1x768xf32, #tpu.memory_space<vmem>>, vector<1x768xf32>
    %22 = vector.broadcast %21 : vector<1x768xf32> to vector<196x768xf32>
    %23 = arith.mulf %20, %22 : vector<196x768xf32>
    %c0_8 = arith.constant 0 : index
    %c0_9 = arith.constant 0 : index
    %24 = vector.load %arg3[%c0_8, %c0_9] : memref<1x768xf32, #tpu.memory_space<vmem>>, vector<1x768xf32>
    %25 = vector.broadcast %24 : vector<1x768xf32> to vector<196x768xf32>
    %26 = arith.addf %23, %25 : vector<196x768xf32>
    %c0_10 = arith.constant 0 : index
    %c0_11 = arith.constant 0 : index
    %27 = vector.load %arg4[%c0_10, %c0_11] : memref<196x768xf32, #tpu.memory_space<vmem>>, vector<196x768xf32>
    tpu.vector_store %arg4[%c0_10, %c0_11], %26 {strides = array<i32>} : memref<196x768xf32, #tpu.memory_space<vmem>>, vector<196x768xf32>,
    return
  }
  func.func @transform_0(%arg0: i32) -> (i32, i32) {
    %c0_i32 = arith.constant 0 : i32
    %c0_i32_0 = arith.constant 0 : i32
    return %arg0, %c0_i32 : i32, i32
  }
  func.func @transform_1(%arg0: i32) -> (i32, i32) {
    %c0_i32 = arith.constant 0 : i32
    %c0_i32_0 = arith.constant 0 : i32
    %c0_i32_1 = arith.constant 0 : i32
    return %c0_i32, %c0_i32_0 : i32, i32
  }
  func.func @transform_2(%arg0: i32) -> (i32, i32) {
    %c0_i32 = arith.constant 0 : i32
    %c0_i32_0 = arith.constant 0 : i32
    %c0_i32_1 = arith.constant 0 : i32
    return %c0_i32, %c0_i32_0 : i32, i32
  }
  func.func @transform_3(%arg0: i32) -> (i32, i32) {
    %c0_i32 = arith.constant 0 : i32
    %c0_i32_0 = arith.constant 0 : i32
    return %arg0, %c0_i32 : i32, i32
  }
}

</mosaic_0001>

<llo_original>
// kernel: tpu_custom_call.1
$region0: #{tpu_custom_call.1}
  #allocation0 [shape = 'u32[]', space=smem, size = 0x4, offset = 0x4, fixed_abs, tag = 'smem constant byte address 0x4 - core index']
  #allocation1 [shape = 'u32[144,128]{1,0:T(1,128)}', space=vmem, size = 0x12000, scoped, tag = 'internal scratch']
  %s0 = inlined_call_operand.hbm [shape: f32[196,768], index: 0, kind: input, shape index: {}]
  %s1 = inlined_call_operand.hbm [shape: f32[1,768], index: 1, kind: input, shape index: {}]
  %s2 = inlined_call_operand.vmem [shape: f32[1,768], index: 2, kind: input, shape index: {}]
  %s3 = inlined_call_operand.hbm [shape: f32[196,768], index: 3, kind: output, shape index: {}]
  %s4 = sld [smem:[#allocation0]]
  $region30: #{tpu_custom_call.1} parent=0
    _
  %s6 = ssub.s32 1, %s4
  %s7 = scalar_select 0, %s6, %s4
  $region1: #{tpu_custom_call.1} parent=0
    #allocation2 [shape = 'u8[614400]{0}', space=vmem, size = 0x96000, scoped, tag = 'input window, operand 0, single buffered']
    #allocation3 [shape = 's32[1]{0}', space=sflag, size = 0x4, scoped, tag = 'scoped memory for tpu_custom_call.1']
    #allocation4 [shape = 's32[1]{0}', space=sflag, size = 0x4, scoped, tag = 'scoped memory for tpu_custom_call.1']
    #allocation5 [shape = 'u8[3072]{0}', space=vmem, size = 0xc00, scoped, tag = 'input window, operand 1, single buffered']
    #allocation6 [shape = 's32[1]{0}', space=sflag, size = 0x4, scoped, tag = 'scoped memory for tpu_custom_call.1']
    #allocation7 [shape = 'u8[614400]{0}', space=vmem, size = 0x96000, scoped, tag = 'output window, operand 0, single buffered']
    %8 = vsyncpa [#allocation3], 0
    %9 = vsyncpa [#allocation6], 0
    %10 = vsyncpa [#allocation4], 0
    // Predicated region
    $region2: #{tpu_custom_call.1} parent=1 // pred_check
      _
    $region3: #{tpu_custom_call.1} parent=1 // pred_check_branch
      %12 = sbr.rel (0) target = $region5
    $region4: #{tpu_custom_call.1} parent=1 // pred_region
      %s14 = ssub.s32 19200, 19200
      %15 = vsyncadd [#allocation3], %s14
      %s16 = sshll.u32 [#allocation2], 4
      %s17 = int_to_ptr.vmem [resolvable:$true] %s16
      %22 = dma.hbm_to_vmem [thread:$0]  %s0, 19200, %s17, [#allocation3], 768, 768, 48
    $region5: #{tpu_custom_call.1} parent=1 // pred_fallthru
      _
    // Predicated region
    $region6: #{tpu_custom_call.1} parent=1 // pred_check
      _
    $region7: #{tpu_custom_call.1} parent=1 // pred_check_branch
      %24 = sbr.rel (0) target = $region9
    $region8: #{tpu_custom_call.1} parent=1 // pred_region
      %s26 = ssub.s32 96, 96
      %27 = vsyncadd [#allocation6], %s26
      %s29 = sshll.u32 [#allocation5], 4
      %s30 = int_to_ptr.vmem [resolvable:$true] %s29
      %32 = dma.hbm_to_vmem [thread:$0]  %s1, 96, %s30, [#allocation6]
    $region9: #{tpu_custom_call.1} parent=1 // pred_fallthru
      _
    // Predicated region
    $region10: #{tpu_custom_call.1} parent=1 // pred_check
      _
    $region11: #{tpu_custom_call.1} parent=1 // pred_check_branch
      %34 = sbr.rel (0) target = $region13
    $region12: #{tpu_custom_call.1} parent=1 // pred_region
      _
    $region13: #{tpu_custom_call.1} parent=1 // pred_fallthru
      _
    // Predicated region
    $region14: #{tpu_custom_call.1} parent=1 // pred_check
      _
    $region15: #{tpu_custom_call.1} parent=1 // pred_check_branch
      %36 = sbr.rel (0) target = $region17
    $region16: #{tpu_custom_call.1} parent=1 // pred_region
      %37 = dma.done [#allocation3], 19200
    $region17: #{tpu_custom_call.1} parent=1 // pred_fallthru
      _
    // Predicated region
    $region18: #{tpu_custom_call.1} parent=1 // pred_check
      _
    $region19: #{tpu_custom_call.1} parent=1 // pred_check_branch
      %39 = sbr.rel (0) target = $region21
    $region20: #{tpu_custom_call.1} parent=1 // pred_region
      %40 = dma.done [#allocation6], 96
    $region21: #{tpu_custom_call.1} parent=1 // pred_fallthru
      _
    %v41 = vld [vmem:[#allocation2] sm:$0xff]
    %v42 = vld [vmem:[#allocation2 + $0x8] sm:$0xff]
    %v43 = vld [vmem:[#allocation2 + $0x10] sm:$0xff]
    %v44 = vld [vmem:[#allocation2 + $0x18] sm:$0xff]
    %v45 = vld [vmem:[#allocation2 + $0x20] sm:$0xff]
    %v46 = vld [vmem:[#allocation2 + $0x28] sm:$0xff]
    %v47 = vld [vmem:[#allocation2 + $0x30] sm:$0xff]
    %v48 = vld [vmem:[#allocation2 + $0x38] sm:$0xff]
    %v49 = vld [vmem:[#allocation2 + $0x40] sm:$0xff]
    %v50 = vld [vmem:[#allocation2 + $0x48] sm:$0xff]
    %v51 = vld [vmem:[#allocation2 + $0x50] sm:$0xff]
    %v52 = vld [vmem:[#allocation2 + $0x58] sm:$0xff]
    %v53 = vld [vmem:[#allocation2 + $0x60] sm:$0xff]
    %v54 = vld [vmem:[#allocation2 + $0x68] sm:$0xff]
    %v55 = vld [vmem:[#allocation2 + $0x70] sm:$0xff]
    %v56 = vld [vmem:[#allocation2 + $0x78] sm:$0xff]
    %v57 = vld [vmem:[#allocation2 + $0x80] sm:$0xff]
    %v58 = vld [vmem:[#allocation2 + $0x88] sm:$0xff]
    %v59 = vld [vmem:[#allocation2 + $0x90] sm:$0xff]
    %v60 = vld [vmem:[#allocation2 + $0x98] sm:$0xff]
    %v61 = vld [vmem:[#allocation2 + $0xa0] sm:$0xff]
    %v62 = vld [vmem:[#allocation2 + $0xa8] sm:$0xff]
    %v63 = vld [vmem:[#allocation2 + $0xb0] sm:$0xff]
    %v64 = vld [vmem:[#allocation2 + $0xb8] sm:$0xff]
    %v65 = vld [vmem:[#allocation2 + $0xc0] sm:$0xff]
    %v66 = vld [vmem:[#allocation2 + $0xc8] sm:$0xff]
    %v67 = vld [vmem:[#allocation2 + $0xd0] sm:$0xff]
    %v68 = vld [vmem:[#allocation2 + $0xd8] sm:$0xff]
    %v69 = vld [vmem:[#allocation2 + $0xe0] sm:$0xff]
    %v70 = vld [vmem:[#allocation2 + $0xe8] sm:$0xff]
    %v71 = vld [vmem:[#allocation2 + $0xf0] sm:$0xff]
    %v72 = vld [vmem:[#allocation2 + $0xf8] sm:$0xff]
    %v73 = vld [vmem:[#allocation2 + $0x100] sm:$0xff]
    %v74 = vld [vmem:[#allocation2 + $0x108] sm:$0xff]
    %v75 = vld [vmem:[#allocation2 + $0x110] sm:$0xff]
    %v76 = vld [vmem:[#allocation2 + $0x118] sm:$0xff]
    %v77 = vld [vmem:[#allocation2 + $0x120] sm:$0xff]
    %v78 = vld [vmem:[#allocation2 + $0x128] sm:$0xff]
    %v79 = vld [vmem:[#allocation2 + $0x130] sm:$0xff]
    %v80 = vld [vmem:[#allocation2 + $0x138] sm:$0xff]
    %v81 = vld [vmem:[#allocation2 + $0x140] sm:$0xff]
    %v82 = vld [vmem:[#allocation2 + $0x148] sm:$0xff]
    %v83 = vld [vmem:[#allocation2 + $0x150] sm:$0xff]
    %v84 = vld [vmem:[#allocation2 + $0x158] sm:$0xff]
    %v85 = vld [vmem:[#allocation2 + $0x160] sm:$0xff]
    %v86 = vld [vmem:[#allocation2 + $0x168] sm:$0xff]
    %v87 = vld [vmem:[#allocation2 + $0x170] sm:$0xff]
    %v88 = vld [vmem:[#allocation2 + $0x178] sm:$0xff]
    %v89 = vld [vmem:[#allocation2 + $0x180] sm:$0xff]
    %v90 = vld [vmem:[#allocation2 + $0x188] sm:$0xff]
    %v91 = vld [vmem:[#allocation2 + $0x190] sm:$0xff]
    %v92 = vld [vmem:[#allocation2 + $0x198] sm:$0xff]
    %v93 = vld [vmem:[#allocation2 + $0x1a0] sm:$0xff]
    %v94 = vld [vmem:[#allocation2 + $0x1a8] sm:$0xff]
    %v95 = vld [vmem:[#allocation2 + $0x1b0] sm:$0xff]
    %v96 = vld [vmem:[#allocation2 + $0x1b8] sm:$0xff]
    %v97 = vld [vmem:[#allocation2 + $0x1c0] sm:$0xff]
    %v98 = vld [vmem:[#allocation2 + $0x1c8] sm:$0xff]
    %v99 = vld [vmem:[#allocation2 + $0x1d0] sm:$0xff]
    %v100 = vld [vmem:[#allocation2 + $0x1d8] sm:$0xff]
    %v101 = vld [vmem:[#allocation2 + $0x1e0] sm:$0xff]
    %v102 = vld [vmem:[#allocation2 + $0x1e8] sm:$0xff]
    %v103 = vld [vmem:[#allocation2 + $0x1f0] sm:$0xff]
    %v104 = vld [vmem:[#allocation2 + $0x1f8] sm:$0xff]
    %v105 = vld [vmem:[#allocation2 + $0x200] sm:$0xff]
    %v106 = vld [vmem:[#allocation2 + $0x208] sm:$0xff]
    %v107 = vld [vmem:[#allocation2 + $0x210] sm:$0xff]
    %v108 = vld [vmem:[#allocation2 + $0x218] sm:$0xff]
    %v109 = vld [vmem:[#allocation2 + $0x220] sm:$0xff]
    %v110 = vld [vmem:[#allocation2 + $0x228] sm:$0xff]
    %v111 = vld [vmem:[#allocation2 + $0x230] sm:$0xff]
    %v112 = vld [vmem:[#allocation2 + $0x238] sm:$0xff]
    %v113 = vld [vmem:[#allocation2 + $0x240] sm:$0xff]
    %v114 = vld [vmem:[#allocation2 + $0x248] sm:$0xff]
    %v115 = vld [vmem:[#allocation2 + $0x250] sm:$0xff]
    %v116 = vld [vmem:[#allocation2 + $0x258] sm:$0xff]
    %v117 = vld [vmem:[#allocation2 + $0x260] sm:$0xff]
    %v118 = vld [vmem:[#allocation2 + $0x268] sm:$0xff]
    %v119 = vld [vmem:[#allocation2 + $0x270] sm:$0xff]
    %v120 = vld [vmem:[#allocation2 + $0x278] sm:$0xff]
    %v121 = vld [vmem:[#allocation2 + $0x280] sm:$0xff]
    %v122 = vld [vmem:[#allocation2 + $0x288] sm:$0xff]
    %v123 = vld [vmem:[#allocation2 + $0x290] sm:$0xff]
    %v124 = vld [vmem:[#allocation2 + $0x298] sm:$0xff]
    %v125 = vld [vmem:[#allocation2 + $0x2a0] sm:$0xff]
    %v126 = vld [vmem:[#allocation2 + $0x2a8] sm:$0xff]
    %v127 = vld [vmem:[#allocation2 + $0x2b0] sm:$0xff]
    %v128 = vld [vmem:[#allocation2 + $0x2b8] sm:$0xff]
    %v129 = vld [vmem:[#allocation2 + $0x2c0] sm:$0xff]
    %v130 = vld [vmem:[#allocation2 + $0x2c8] sm:$0xff]
    %v131 = vld [vmem:[#allocation2 + $0x2d0] sm:$0xff]
    %v132 = vld [vmem:[#allocation2 + $0x2d8] sm:$0xff]
    %v133 = vld [vmem:[#allocation2 + $0x2e0] sm:$0xff]
    %v134 = vld [vmem:[#allocation2 + $0x2e8] sm:$0xff]
    %v135 = vld [vmem:[#allocation2 + $0x2f0] sm:$0xff]
    %v136 = vld [vmem:[#allocation2 + $0x2f8] sm:$0xff]
    %v137 = vld [vmem:[#allocation2 + $0x300] sm:$0xff]
    %v138 = vld [vmem:[#allocation2 + $0x308] sm:$0xff]
    %v139 = vld [vmem:[#allocation2 + $0x310] sm:$0xff]
    %v140 = vld [vmem:[#allocation2 + $0x318] sm:$0xff]
    %v141 = vld [vmem:[#allocation2 + $0x320] sm:$0xff]
    %v142 = vld [vmem:[#allocation2 + $0x328] sm:$0xff]
    %v143 = vld [vmem:[#allocation2 + $0x330] sm:$0xff]
    %v144 = vld [vmem:[#allocation2 + $0x338] sm:$0xff]
    %v145 = vld [vmem:[#allocation2 + $0x340] sm:$0xff]
    %v146 = vld [vmem:[#allocation2 + $0x348] sm:$0xff]
    %v147 = vld [vmem:[#allocation2 + $0x350] sm:$0xff]
    %v148 = vld [vmem:[#allocation2 + $0x358] sm:$0xff]
    %v149 = vld [vmem:[#allocation2 + $0x360] sm:$0xff]
    %v150 = vld [vmem:[#allocation2 + $0x368] sm:$0xff]
    %v151 = vld [vmem:[#allocation2 + $0x370] sm:$0xff]
    %v152 = vld [vmem:[#allocation2 + $0x378] sm:$0xff]
    %v153 = vld [vmem:[#allocation2 + $0x380] sm:$0xff]
    %v154 = vld [vmem:[#allocation2 + $0x388] sm:$0xff]
    %v155 = vld [vmem:[#allocation2 + $0x390] sm:$0xff]
    %v156 = vld [vmem:[#allocation2 + $0x398] sm:$0xff]
    %v157 = vld [vmem:[#allocation2 + $0x3a0] sm:$0xff]
    %v158 = vld [vmem:[#allocation2 + $0x3a8] sm:$0xff]
    %v159 = vld [vmem:[#allocation2 + $0x3b0] sm:$0xff]
    %v160 = vld [vmem:[#allocation2 + $0x3b8] sm:$0xff]
    %v161 = vld [vmem:[#allocation2 + $0x3c0] sm:$0xff]
    %v162 = vld [vmem:[#allocation2 + $0x3c8] sm:$0xff]
    %v163 = vld [vmem:[#allocation2 + $0x3d0] sm:$0xff]
    %v164 = vld [vmem:[#allocation2 + $0x3d8] sm:$0xff]
    %v165 = vld [vmem:[#allocation2 + $0x3e0] sm:$0xff]
    %v166 = vld [vmem:[#allocation2 + $0x3e8] sm:$0xff]
    %v167 = vld [vmem:[#allocation2 + $0x3f0] sm:$0xff]
    %v168 = vld [vmem:[#allocation2 + $0x3f8] sm:$0xff]
    %v169 = vld [vmem:[#allocation2 + $0x400] sm:$0xff]
    %v170 = vld [vmem:[#allocation2 + $0x408] sm:$0xff]
    %v171 = vld [vmem:[#allocation2 + $0x410] sm:$0xff]
    %v172 = vld [vmem:[#allocation2 + $0x418] sm:$0xff]
    %v173 = vld [vmem:[#allocation2 + $0x420] sm:$0xff]
    %v174 = vld [vmem:[#allocation2 + $0x428] sm:$0xff]
    %v175 = vld [vmem:[#allocation2 + $0x430] sm:$0xff]
    %v176 = vld [vmem:[#allocation2 + $0x438] sm:$0xff]
    %v177 = vld [vmem:[#allocation2 + $0x440] sm:$0xff]
    %v178 = vld [vmem:[#allocation2 + $0x448] sm:$0xff]
    %v179 = vld [vmem:[#allocation2 + $0x450] sm:$0xff]
    %v180 = vld [vmem:[#allocation2 + $0x458] sm:$0xff]
    %v181 = vld [vmem:[#allocation2 + $0x460] sm:$0xff]
    %v182 = vld [vmem:[#allocation2 + $0x468] sm:$0xff]
    %v183 = vld [vmem:[#allocation2 + $0x470] sm:$0xff]
    %v184 = vld [vmem:[#allocation2 + $0x478] sm:$0xff]
    %v185 = vld [vmem:[#allocation2 + $0x480] sm:$0xf]
    %v186 = vld [vmem:[#allocation2 + $0x488] sm:$0xf]
    %v187 = vld [vmem:[#allocation2 + $0x490] sm:$0xf]
    %v188 = vld [vmem:[#allocation2 + $0x498] sm:$0xf]
    %v189 = vld [vmem:[#allocation2 + $0x4a0] sm:$0xf]
    %v190 = vld [vmem:[#allocation2 + $0x4a8] sm:$0xf]
    %v191 = vadd.f32 %v41, %v42
    %v192 = vadd.f32 %v191, %v43
    %v193 = vadd.f32 %v192, %v44
    %v194 = vadd.f32 %v193, %v45
    %v195 = vadd.f32 %v194, %v46
    %196 = vadd.xlane.f32.xlu0 %v195
    %v197 = vpop.xlane.xlu0 %196
    %v198 = vadd.f32 %v47, %v48
    %v199 = vadd.f32 %v198, %v49
    %v200 = vadd.f32 %v199, %v50
    %v201 = vadd.f32 %v200, %v51
    %v202 = vadd.f32 %v201, %v52
    %203 = vadd.xlane.f32.xlu0 %v202
    %v204 = vpop.xlane.xlu0 %203
    %v205 = vadd.f32 %v53, %v54
    %v206 = vadd.f32 %v205, %v55
    %v207 = vadd.f32 %v206, %v56
    %v208 = vadd.f32 %v207, %v57
    %v209 = vadd.f32 %v208, %v58
    %210 = vadd.xlane.f32.xlu0 %v209
    %v211 = vpop.xlane.xlu0 %210
    %v212 = vadd.f32 %v59, %v60
    %v213 = vadd.f32 %v212, %v61
    %v214 = vadd.f32 %v213, %v62
    %v215 = vadd.f32 %v214, %v63
    %v216 = vadd.f32 %v215, %v64
    %217 = vadd.xlane.f32.xlu0 %v216
    %v218 = vpop.xlane.xlu0 %217
    %v219 = vadd.f32 %v65, %v66
    %v220 = vadd.f32 %v219, %v67
    %v221 = vadd.f32 %v220, %v68
    %v222 = vadd.f32 %v221, %v69
    %v223 = vadd.f32 %v222, %v70
    %224 = vadd.xlane.f32.xlu0 %v223
    %v225 = vpop.xlane.xlu0 %224
    %v226 = vadd.f32 %v71, %v72
    %v227 = vadd.f32 %v226, %v73
    %v228 = vadd.f32 %v227, %v74
    %v229 = vadd.f32 %v228, %v75
    %v230 = vadd.f32 %v229, %v76
    %231 = vadd.xlane.f32.xlu0 %v230
    %v232 = vpop.xlane.xlu0 %231
    %v233 = vadd.f32 %v77, %v78
    %v234 = vadd.f32 %v233, %v79
    %v235 = vadd.f32 %v234, %v80
    %v236 = vadd.f32 %v235, %v81
    %v237 = vadd.f32 %v236, %v82
    %238 = vadd.xlane.f32.xlu0 %v237
    %v239 = vpop.xlane.xlu0 %238
    %v240 = vadd.f32 %v83, %v84
    %v241 = vadd.f32 %v240, %v85
    %v242 = vadd.f32 %v241, %v86
    %v243 = vadd.f32 %v242, %v87
    %v244 = vadd.f32 %v243, %v88
    %245 = vadd.xlane.f32.xlu0 %v244
    %v246 = vpop.xlane.xlu0 %245
    %v247 = vadd.f32 %v89, %v90
    %v248 = vadd.f32 %v247, %v91
    %v249 = vadd.f32 %v248, %v92
    %v250 = vadd.f32 %v249, %v93
    %v251 = vadd.f32 %v250, %v94
    %252 = vadd.xlane.f32.xlu0 %v251
    %v253 = vpop.xlane.xlu0 %252
    %v254 = vadd.f32 %v95, %v96
    %v255 = vadd.f32 %v254, %v97
    %v256 = vadd.f32 %v255, %v98
    %v257 = vadd.f32 %v256, %v99
    %v258 = vadd.f32 %v257, %v100
    %259 = vadd.xlane.f32.xlu0 %v258
    %v260 = vpop.xlane.xlu0 %259
    %v261 = vadd.f32 %v101, %v102
    %v262 = vadd.f32 %v261, %v103
    %v263 = vadd.f32 %v262, %v104
    %v264 = vadd.f32 %v263, %v105
    %v265 = vadd.f32 %v264, %v106
    %266 = vadd.xlane.f32.xlu0 %v265
    %v267 = vpop.xlane.xlu0 %266
    %v268 = vadd.f32 %v107, %v108
    %v269 = vadd.f32 %v268, %v109
    %v270 = vadd.f32 %v269, %v110
    %v271 = vadd.f32 %v270, %v111
    %v272 = vadd.f32 %v271, %v112
    %273 = vadd.xlane.f32.xlu0 %v272
    %v274 = vpop.xlane.xlu0 %273
    %v275 = vadd.f32 %v113, %v114
    %v276 = vadd.f32 %v275, %v115
    %v277 = vadd.f32 %v276, %v116
    %v278 = vadd.f32 %v277, %v117
    %v279 = vadd.f32 %v278, %v118
    %280 = vadd.xlane.f32.xlu0 %v279
    %v281 = vpop.xlane.xlu0 %280
    %v282 = vadd.f32 %v119, %v120
    %v283 = vadd.f32 %v282, %v121
    %v284 = vadd.f32 %v283, %v122
    %v285 = vadd.f32 %v284, %v123
    %v286 = vadd.f32 %v285, %v124
    %287 = vadd.xlane.f32.xlu0 %v286
    %v288 = vpop.xlane.xlu0 %287
    %v289 = vadd.f32 %v125, %v126
    %v290 = vadd.f32 %v289, %v127
    %v291 = vadd.f32 %v290, %v128
    %v292 = vadd.f32 %v291, %v129
    %v293 = vadd.f32 %v292, %v130
    %294 = vadd.xlane.f32.xlu0 %v293
    %v295 = vpop.xlane.xlu0 %294
    %v296 = vadd.f32 %v131, %v132
    %v297 = vadd.f32 %v296, %v133
    %v298 = vadd.f32 %v297, %v134
    %v299 = vadd.f32 %v298, %v135
    %v300 = vadd.f32 %v299, %v136
    %301 = vadd.xlane.f32.xlu0 %v300
    %v302 = vpop.xlane.xlu0 %301
    %v303 = vadd.f32 %v137, %v138
    %v304 = vadd.f32 %v303, %v139
    %v305 = vadd.f32 %v304, %v140
    %v306 = vadd.f32 %v305, %v141
    %v307 = vadd.f32 %v306, %v142
    %308 = vadd.xlane.f32.xlu0 %v307
    %v309 = vpop.xlane.xlu0 %308
    %v310 = vadd.f32 %v143, %v144
    %v311 = vadd.f32 %v310, %v145
    %v312 = vadd.f32 %v311, %v146
    %v313 = vadd.f32 %v312, %v147
    %v314 = vadd.f32 %v313, %v148
    %315 = vadd.xlane.f32.xlu0 %v314
    %v316 = vpop.xlane.xlu0 %315
    %v317 = vadd.f32 %v149, %v150
    %v318 = vadd.f32 %v317, %v151
    %v319 = vadd.f32 %v318, %v152
    %v320 = vadd.f32 %v319, %v153
    %v321 = vadd.f32 %v320, %v154
    %322 = vadd.xlane.f32.xlu0 %v321
    %v323 = vpop.xlane.xlu0 %322
    %v324 = vadd.f32 %v155, %v156
    %v325 = vadd.f32 %v324, %v157
    %v326 = vadd.f32 %v325, %v158
    %v327 = vadd.f32 %v326, %v159
    %v328 = vadd.f32 %v327, %v160
    %329 = vadd.xlane.f32.xlu0 %v328
    %v330 = vpop.xlane.xlu0 %329
    %v331 = vadd.f32 %v161, %v162
    %v332 = vadd.f32 %v331, %v163
    %v333 = vadd.f32 %v332, %v164
    %v334 = vadd.f32 %v333, %v165
    %v335 = vadd.f32 %v334, %v166
    %336 = vadd.xlane.f32.xlu0 %v335
    %v337 = vpop.xlane.xlu0 %336
    %v338 = vadd.f32 %v167, %v168
    %v339 = vadd.f32 %v338, %v169
    %v340 = vadd.f32 %v339, %v170
    %v341 = vadd.f32 %v340, %v171
    %v342 = vadd.f32 %v341, %v172
    %343 = vadd.xlane.f32.xlu0 %v342
    %v344 = vpop.xlane.xlu0 %343
    %v345 = vadd.f32 %v173, %v174
    %v346 = vadd.f32 %v345, %v175
    %v347 = vadd.f32 %v346, %v176
    %v348 = vadd.f32 %v347, %v177
    %v349 = vadd.f32 %v348, %v178
    %350 = vadd.xlane.f32.xlu0 %v349
    %v351 = vpop.xlane.xlu0 %350
    %v352 = vadd.f32 %v179, %v180
    %v353 = vadd.f32 %v352, %v181
    %v354 = vadd.f32 %v353, %v182
    %v355 = vadd.f32 %v354, %v183
    %v356 = vadd.f32 %v355, %v184
    %357 = vadd.xlane.f32.xlu0 %v356
    %v358 = vpop.xlane.xlu0 %357
    %vm359 = vcmask 1043456
    %v360 = vsel %vm359, %v185, 0.0
    %v361 = vsel %vm359, %v186, 0.0
    %v362 = vadd.f32 %v360, %v361
    %v363 = vsel %vm359, %v187, 0.0
    %v364 = vadd.f32 %v362, %v363
    %v365 = vsel %vm359, %v188, 0.0
    %v366 = vadd.f32 %v364, %v365
    %v367 = vsel %vm359, %v189, 0.0
    %v368 = vadd.f32 %v366, %v367
    %v369 = vsel %vm359, %v190, 0.0
    %v370 = vadd.f32 %v368, %v369
    %371 = vadd.xlane.f32.xlu0 %v370
    %v372 = vpop.xlane.xlu0 %371
    %v373 = vmul.f32 %v41, %v41
    %v374 = vmul.f32 %v42, %v42
    %v375 = vmul.f32 %v43, %v43
    %v376 = vmul.f32 %v44, %v44
    %v377 = vmul.f32 %v45, %v45
    %v378 = vmul.f32 %v46, %v46
    %v379 = vmul.f32 %v47, %v47
    %v380 = vmul.f32 %v48, %v48
    %v381 = vmul.f32 %v49, %v49
    %v382 = vmul.f32 %v50, %v50
    %v383 = vmul.f32 %v51, %v51
    %v384 = vmul.f32 %v52, %v52
    %v385 = vmul.f32 %v53, %v53
    %v386 = vmul.f32 %v54, %v54
    %v387 = vmul.f32 %v55, %v55
    %v388 = vmul.f32 %v56, %v56
    %v389 = vmul.f32 %v57, %v57
    %v390 = vmul.f32 %v58, %v58
    %v391 = vmul.f32 %v59, %v59
    %v392 = vmul.f32 %v60, %v60
    %v393 = vmul.f32 %v61, %v61
    %v394 = vmul.f32 %v62, %v62
    %v395 = vmul.f32 %v63, %v63
    %v396 = vmul.f32 %v64, %v64
    %v397 = vmul.f32 %v65, %v65
    %v398 = vmul.f32 %v66, %v66
    %v399 = vmul.f32 %v67, %v67
    %v400 = vmul.f32 %v68, %v68
    %v401 = vmul.f32 %v69, %v69
    %v402 = vmul.f32 %v70, %v70
    %v403 = vmul.f32 %v71, %v71
    %v404 = vmul.f32 %v72, %v72
    %v405 = vmul.f32 %v73, %v73
    %v406 = vmul.f32 %v74, %v74
    %v407 = vmul.f32 %v75, %v75
    %v408 = vmul.f32 %v76, %v76
    %v409 = vmul.f32 %v77, %v77
    %v410 = vmul.f32 %v78, %v78
    %v411 = vmul.f32 %v79, %v79
    %v412 = vmul.f32 %v80, %v80
    %v413 = vmul.f32 %v81, %v81
    %v414 = vmul.f32 %v82, %v82
    %v415 = vmul.f32 %v83, %v83
    %v416 = vmul.f32 %v84, %v84
    %v417 = vmul.f32 %v85, %v85
    %v418 = vmul.f32 %v86, %v86
    %v419 = vmul.f32 %v87, %v87
    %v420 = vmul.f32 %v88, %v88
    %v421 = vmul.f32 %v89, %v89
    %v422 = vmul.f32 %v90, %v90
    %v423 = vmul.f32 %v91, %v91
    %v424 = vmul.f32 %v92, %v92
    %v425 = vmul.f32 %v93, %v93
    %v426 = vmul.f32 %v94, %v94
    %v427 = vmul.f32 %v95, %v95
    %v428 = vmul.f32 %v96, %v96
    %v429 = vmul.f32 %v97, %v97
    %v430 = vmul.f32 %v98, %v98
    %v431 = vmul.f32 %v99, %v99
    %v432 = vmul.f32 %v100, %v100
    %v433 = vmul.f32 %v101, %v101
    %v434 = vmul.f32 %v102, %v102
    %v435 = vmul.f32 %v103, %v103
    %v436 = vmul.f32 %v104, %v104
    %v437 = vmul.f32 %v105, %v105
    %v438 = vmul.f32 %v106, %v106
    %v439 = vmul.f32 %v107, %v107
    %v440 = vmul.f32 %v108, %v108
    %v441 = vmul.f32 %v109, %v109
    %v442 = vmul.f32 %v110, %v110
    %v443 = vmul.f32 %v111, %v111
    %v444 = vmul.f32 %v112, %v112
    %v445 = vmul.f32 %v113, %v113
    %v446 = vmul.f32 %v114, %v114
    %v447 = vmul.f32 %v115, %v115
    %v448 = vmul.f32 %v116, %v116
    %v449 = vmul.f32 %v117, %v117
    %v450 = vmul.f32 %v118, %v118
    %v451 = vmul.f32 %v119, %v119
    %v452 = vmul.f32 %v120, %v120
    %v453 = vmul.f32 %v121, %v121
    %v454 = vmul.f32 %v122, %v122
    %v455 = vmul.f32 %v123, %v123
    %v456 = vmul.f32 %v124, %v124
    %v457 = vmul.f32 %v125, %v125
    %v458 = vmul.f32 %v126, %v126
    %v459 = vmul.f32 %v127, %v127
    %v460 = vmul.f32 %v128, %v128
    %v461 = vmul.f32 %v129, %v129
    %v462 = vmul.f32 %v130, %v130
    %v463 = vmul.f32 %v131, %v131
    %v464 = vmul.f32 %v132, %v132
    %v465 = vmul.f32 %v133, %v133
    %v466 = vmul.f32 %v134, %v134
    %v467 = vmul.f32 %v135, %v135
    %v468 = vmul.f32 %v136, %v136
    %v469 = vmul.f32 %v137, %v137
    %v470 = vmul.f32 %v138, %v138
    %v471 = vmul.f32 %v139, %v139
    %v472 = vmul.f32 %v140, %v140
    %v473 = vmul.f32 %v141, %v141
    %v474 = vmul.f32 %v142, %v142
    %v475 = vmul.f32 %v143, %v143
    %v476 = vmul.f32 %v144, %v144
    %v477 = vmul.f32 %v145, %v145
    %v478 = vmul.f32 %v146, %v146
    %v479 = vmul.f32 %v147, %v147
    %v480 = vmul.f32 %v148, %v148
    %v481 = vmul.f32 %v149, %v149
    %v482 = vmul.f32 %v150, %v150
    %v483 = vmul.f32 %v151, %v151
    %v484 = vmul.f32 %v152, %v152
    %v485 = vmul.f32 %v153, %v153
    %v486 = vmul.f32 %v154, %v154
    %v487 = vmul.f32 %v155, %v155
    %v488 = vmul.f32 %v156, %v156
    %v489 = vmul.f32 %v157, %v157
    %v490 = vmul.f32 %v158, %v158
    %v491 = vmul.f32 %v159, %v159
    %v492 = vmul.f32 %v160, %v160
    %v493 = vmul.f32 %v161, %v161
    %v494 = vmul.f32 %v162, %v162
    %v495 = vmul.f32 %v163, %v163
    %v496 = vmul.f32 %v164, %v164
    %v497 = vmul.f32 %v165, %v165
    %v498 = vmul.f32 %v166, %v166
    %v499 = vmul.f32 %v167, %v167
    %v500 = vmul.f32 %v168, %v168
    %v501 = vmul.f32 %v169, %v169
    %v502 = vmul.f32 %v170, %v170
    %v503 = vmul.f32 %v171, %v171
    %v504 = vmul.f32 %v172, %v172
    %v505 = vmul.f32 %v173, %v173
    %v506 = vmul.f32 %v174, %v174
    %v507 = vmul.f32 %v175, %v175
    %v508 = vmul.f32 %v176, %v176
    %v509 = vmul.f32 %v177, %v177
    %v510 = vmul.f32 %v178, %v178
    %v511 = vmul.f32 %v179, %v179
    %v512 = vmul.f32 %v180, %v180
    %v513 = vmul.f32 %v181, %v181
    %v514 = vmul.f32 %v182, %v182
    %v515 = vmul.f32 %v183, %v183
    %v516 = vmul.f32 %v184, %v184
    %v517 = vmul.f32 %v185, %v185
    %v518 = vmul.f32 %v186, %v186
    %v519 = vmul.f32 %v187, %v187
    %v520 = vmul.f32 %v188, %v188
    %v521 = vmul.f32 %v189, %v189
    %v522 = vmul.f32 %v190, %v190
    %v523 = vadd.f32 %v373, %v374
    %v524 = vadd.f32 %v523, %v375
    %v525 = vadd.f32 %v524, %v376
    %v526 = vadd.f32 %v525, %v377
    %v527 = vadd.f32 %v526, %v378
    %528 = vadd.xlane.f32.xlu0 %v527
    %v529 = vpop.xlane.xlu0 %528
    %v530 = vadd.f32 %v379, %v380
    %v531 = vadd.f32 %v530, %v381
    %v532 = vadd.f32 %v531, %v382
    %v533 = vadd.f32 %v532, %v383
    %v534 = vadd.f32 %v533, %v384
    %535 = vadd.xlane.f32.xlu0 %v534
    %v536 = vpop.xlane.xlu0 %535
    %v537 = vadd.f32 %v385, %v386
    %v538 = vadd.f32 %v537, %v387
    %v539 = vadd.f32 %v538, %v388
    %v540 = vadd.f32 %v539, %v389
    %v541 = vadd.f32 %v540, %v390
    %542 = vadd.xlane.f32.xlu0 %v541
    %v543 = vpop.xlane.xlu0 %542
    %v544 = vadd.f32 %v391, %v392
    %v545 = vadd.f32 %v544, %v393
    %v546 = vadd.f32 %v545, %v394
    %v547 = vadd.f32 %v546, %v395
    %v548 = vadd.f32 %v547, %v396
    %549 = vadd.xlane.f32.xlu0 %v548
    %v550 = vpop.xlane.xlu0 %549
    %v551 = vadd.f32 %v397, %v398
    %v552 = vadd.f32 %v551, %v399
    %v553 = vadd.f32 %v552, %v400
    %v554 = vadd.f32 %v553, %v401
    %v555 = vadd.f32 %v554, %v402
    %556 = vadd.xlane.f32.xlu0 %v555
    %v557 = vpop.xlane.xlu0 %556
    %v558 = vadd.f32 %v403, %v404
    %v559 = vadd.f32 %v558, %v405
    %v560 = vadd.f32 %v559, %v406
    %v561 = vadd.f32 %v560, %v407
    %v562 = vadd.f32 %v561, %v408
    %563 = vadd.xlane.f32.xlu0 %v562
    %v564 = vpop.xlane.xlu0 %563
    %v565 = vadd.f32 %v409, %v410
    %v566 = vadd.f32 %v565, %v411
    %v567 = vadd.f32 %v566, %v412
    %v568 = vadd.f32 %v567, %v413
    %v569 = vadd.f32 %v568, %v414
    %570 = vadd.xlane.f32.xlu0 %v569
    %v571 = vpop.xlane.xlu0 %570
    %v572 = vadd.f32 %v415, %v416
    %v573 = vadd.f32 %v572, %v417
    %v574 = vadd.f32 %v573, %v418
    %v575 = vadd.f32 %v574, %v419
    %v576 = vadd.f32 %v575, %v420
    %577 = vadd.xlane.f32.xlu0 %v576
    %v578 = vpop.xlane.xlu0 %577
    %v579 = vadd.f32 %v421, %v422
    %v580 = vadd.f32 %v579, %v423
    %v581 = vadd.f32 %v580, %v424
    %v582 = vadd.f32 %v581, %v425
    %v583 = vadd.f32 %v582, %v426
    %584 = vadd.xlane.f32.xlu0 %v583
    %v585 = vpop.xlane.xlu0 %584
    %v586 = vadd.f32 %v427, %v428
    %v587 = vadd.f32 %v586, %v429
    %v588 = vadd.f32 %v587, %v430
    %v589 = vadd.f32 %v588, %v431
    %v590 = vadd.f32 %v589, %v432
    %591 = vadd.xlane.f32.xlu0 %v590
    %v592 = vpop.xlane.xlu0 %591
    %v593 = vadd.f32 %v433, %v434
    %v594 = vadd.f32 %v593, %v435
    %v595 = vadd.f32 %v594, %v436
    %v596 = vadd.f32 %v595, %v437
    %v597 = vadd.f32 %v596, %v438
    %598 = vadd.xlane.f32.xlu0 %v597
    %v599 = vpop.xlane.xlu0 %598
    %v600 = vadd.f32 %v439, %v440
    %v601 = vadd.f32 %v600, %v441
    %v602 = vadd.f32 %v601, %v442
    %v603 = vadd.f32 %v602, %v443
    %v604 = vadd.f32 %v603, %v444
    %605 = vadd.xlane.f32.xlu0 %v604
    %v606 = vpop.xlane.xlu0 %605
    %v607 = vadd.f32 %v445, %v446
    %v608 = vadd.f32 %v607, %v447
    %v609 = vadd.f32 %v608, %v448
    %v610 = vadd.f32 %v609, %v449
    %v611 = vadd.f32 %v610, %v450
    %612 = vadd.xlane.f32.xlu0 %v611
    %v613 = vpop.xlane.xlu0 %612
    %v614 = vadd.f32 %v451, %v452
    %v615 = vadd.f32 %v614, %v453
    %v616 = vadd.f32 %v615, %v454
    %v617 = vadd.f32 %v616, %v455
    %v618 = vadd.f32 %v617, %v456
    %619 = vadd.xlane.f32.xlu0 %v618
    %v620 = vpop.xlane.xlu0 %619
    %v621 = vadd.f32 %v457, %v458
    %v622 = vadd.f32 %v621, %v459
    %v623 = vadd.f32 %v622, %v460
    %v624 = vadd.f32 %v623, %v461
    %v625 = vadd.f32 %v624, %v462
    %626 = vadd.xlane.f32.xlu0 %v625
    %v627 = vpop.xlane.xlu0 %626
    %v628 = vadd.f32 %v463, %v464
    %v629 = vadd.f32 %v628, %v465
    %v630 = vadd.f32 %v629, %v466
    %v631 = vadd.f32 %v630, %v467
    %v632 = vadd.f32 %v631, %v468
    %633 = vadd.xlane.f32.xlu0 %v632
    %v634 = vpop.xlane.xlu0 %633
    %v635 = vadd.f32 %v469, %v470
    %v636 = vadd.f32 %v635, %v471
    %v637 = vadd.f32 %v636, %v472
    %v638 = vadd.f32 %v637, %v473
    %v639 = vadd.f32 %v638, %v474
    %640 = vadd.xlane.f32.xlu0 %v639
    %v641 = vpop.xlane.xlu0 %640
    %v642 = vadd.f32 %v475, %v476
    %v643 = vadd.f32 %v642, %v477
    %v644 = vadd.f32 %v643, %v478
    %v645 = vadd.f32 %v644, %v479
    %v646 = vadd.f32 %v645, %v480
    %647 = vadd.xlane.f32.xlu0 %v646
    %v648 = vpop.xlane.xlu0 %647
    %v649 = vadd.f32 %v481, %v482
    %v650 = vadd.f32 %v649, %v483
    %v651 = vadd.f32 %v650, %v484
    %v652 = vadd.f32 %v651, %v485
    %v653 = vadd.f32 %v652, %v486
    %654 = vadd.xlane.f32.xlu0 %v653
    %v655 = vpop.xlane.xlu0 %654
    %v656 = vadd.f32 %v487, %v488
    %v657 = vadd.f32 %v656, %v489
    %v658 = vadd.f32 %v657, %v490
    %v659 = vadd.f32 %v658, %v491
    %v660 = vadd.f32 %v659, %v492
    %661 = vadd.xlane.f32.xlu0 %v660
    %v662 = vpop.xlane.xlu0 %661
    %v663 = vadd.f32 %v493, %v494
    %v664 = vadd.f32 %v663, %v495
    %v665 = vadd.f32 %v664, %v496
    %v666 = vadd.f32 %v665, %v497
    %v667 = vadd.f32 %v666, %v498
    %668 = vadd.xlane.f32.xlu0 %v667
    %v669 = vpop.xlane.xlu0 %668
    %v670 = vadd.f32 %v499, %v500
    %v671 = vadd.f32 %v670, %v501
    %v672 = vadd.f32 %v671, %v502
    %v673 = vadd.f32 %v672, %v503
    %v674 = vadd.f32 %v673, %v504
    %675 = vadd.xlane.f32.xlu0 %v674
    %v676 = vpop.xlane.xlu0 %675
    %v677 = vadd.f32 %v505, %v506
    %v678 = vadd.f32 %v677, %v507
    %v679 = vadd.f32 %v678, %v508
    %v680 = vadd.f32 %v679, %v509
    %v681 = vadd.f32 %v680, %v510
    %682 = vadd.xlane.f32.xlu0 %v681
    %v683 = vpop.xlane.xlu0 %682
    %v684 = vadd.f32 %v511, %v512
    %v685 = vadd.f32 %v684, %v513
    %v686 = vadd.f32 %v685, %v514
    %v687 = vadd.f32 %v686, %v515
    %v688 = vadd.f32 %v687, %v516
    %689 = vadd.xlane.f32.xlu0 %v688
    %v690 = vpop.xlane.xlu0 %689
    %v691 = vsel %vm359, %v517, 0.0
    %v692 = vsel %vm359, %v518, 0.0
    %v693 = vadd.f32 %v691, %v692
    %v694 = vsel %vm359, %v519, 0.0
    %v695 = vadd.f32 %v693, %v694
    %v696 = vsel %vm359, %v520, 0.0
    %v697 = vadd.f32 %v695, %v696
    %v698 = vsel %vm359, %v521, 0.0
    %v699 = vadd.f32 %v697, %v698
    %v700 = vsel %vm359, %v522, 0.0
    %v701 = vadd.f32 %v699, %v700
    %702 = vadd.xlane.f32.xlu0 %v701
    %v703 = vpop.xlane.xlu0 %702
    %v704 = vmul.f32 %v197, 0.0013020834
    %v705 = vmul.f32 %v204, 0.0013020834
    %v706 = vmul.f32 %v211, 0.0013020834
    %v707 = vmul.f32 %v218, 0.0013020834
    %v708 = vmul.f32 %v225, 0.0013020834
    %v709 = vmul.f32 %v232, 0.0013020834
    %v710 = vmul.f32 %v239, 0.0013020834
    %v711 = vmul.f32 %v246, 0.0013020834
    %v712 = vmul.f32 %v253, 0.0013020834
    %v713 = vmul.f32 %v260, 0.0013020834
    %v714 = vmul.f32 %v267, 0.0013020834
    %v715 = vmul.f32 %v274, 0.0013020834
    %v716 = vmul.f32 %v281, 0.0013020834
    %v717 = vmul.f32 %v288, 0.0013020834
    %v718 = vmul.f32 %v295, 0.0013020834
    %v719 = vmul.f32 %v302, 0.0013020834
    %v720 = vmul.f32 %v309, 0.0013020834
    %v721 = vmul.f32 %v316, 0.0013020834
    %v722 = vmul.f32 %v323, 0.0013020834
    %v723 = vmul.f32 %v330, 0.0013020834
    %v724 = vmul.f32 %v337, 0.0013020834
    %v725 = vmul.f32 %v344, 0.0013020834
    %v726 = vmul.f32 %v351, 0.0013020834
    %v727 = vmul.f32 %v358, 0.0013020834
    %v728 = vmul.f32 %v372, 0.0013020834
    %v729 = vmul.f32 %v529, 0.0013020834
    %v730 = vmul.f32 %v536, 0.0013020834
    %v731 = vmul.f32 %v543, 0.0013020834
    %v732 = vmul.f32 %v550, 0.0013020834
    %v733 = vmul.f32 %v557, 0.0013020834
    %v734 = vmul.f32 %v564, 0.0013020834
    %v735 = vmul.f32 %v571, 0.0013020834
    %v736 = vmul.f32 %v578, 0.0013020834
    %v737 = vmul.f32 %v585, 0.0013020834
    %v738 = vmul.f32 %v592, 0.0013020834
    %v739 = vmul.f32 %v599, 0.0013020834
    %v740 = vmul.f32 %v606, 0.0013020834
    %v741 = vmul.f32 %v613, 0.0013020834
    %v742 = vmul.f32 %v620, 0.0013020834
    %v743 = vmul.f32 %v627, 0.0013020834
    %v744 = vmul.f32 %v634, 0.0013020834
    %v745 = vmul.f32 %v641, 0.0013020834
    %v746 = vmul.f32 %v648, 0.0013020834
    %v747 = vmul.f32 %v655, 0.0013020834
    %v748 = vmul.f32 %v662, 0.0013020834
    %v749 = vmul.f32 %v669, 0.0013020834
    %v750 = vmul.f32 %v676, 0.0013020834
    %v751 = vmul.f32 %v683, 0.0013020834
    %v752 = vmul.f32 %v690, 0.0013020834
    %v753 = vmul.f32 %v703, 0.0013020834
    %v754 = vmul.f32 %v704, %v704
    %v755 = vmul.f32 %v705, %v705
    %v756 = vmul.f32 %v706, %v706
    %v757 = vmul.f32 %v707, %v707
    %v758 = vmul.f32 %v708, %v708
    %v759 = vmul.f32 %v709, %v709
    %v760 = vmul.f32 %v710, %v710
    %v761 = vmul.f32 %v711, %v711
    %v762 = vmul.f32 %v712, %v712
    %v763 = vmul.f32 %v713, %v713
    %v764 = vmul.f32 %v714, %v714
    %v765 = vmul.f32 %v715, %v715
    %v766 = vmul.f32 %v716, %v716
    %v767 = vmul.f32 %v717, %v717
    %v768 = vmul.f32 %v718, %v718
    %v769 = vmul.f32 %v719, %v719
    %v770 = vmul.f32 %v720, %v720
    %v771 = vmul.f32 %v721, %v721
    %v772 = vmul.f32 %v722, %v722
    %v773 = vmul.f32 %v723, %v723
    %v774 = vmul.f32 %v724, %v724
    %v775 = vmul.f32 %v725, %v725
    %v776 = vmul.f32 %v726, %v726
    %v777 = vmul.f32 %v727, %v727
    %v778 = vmul.f32 %v728, %v728
    %v779 = vsub.f32 %v729, %v754
    %v780 = vsub.f32 %v730, %v755
    %v781 = vsub.f32 %v731, %v756
    %v782 = vsub.f32 %v732, %v757
    %v783 = vsub.f32 %v733, %v758
    %v784 = vsub.f32 %v734, %v759
    %v785 = vsub.f32 %v735, %v760
    %v786 = vsub.f32 %v736, %v761
    %v787 = vsub.f32 %v737, %v762
    %v788 = vsub.f32 %v738, %v763
    %v789 = vsub.f32 %v739, %v764
    %v790 = vsub.f32 %v740, %v765
    %v791 = vsub.f32 %v741, %v766
    %v792 = vsub.f32 %v742, %v767
    %v793 = vsub.f32 %v743, %v768
    %v794 = vsub.f32 %v744, %v769
    %v795 = vsub.f32 %v745, %v770
    %v796 = vsub.f32 %v746, %v771
    %v797 = vsub.f32 %v747, %v772
    %v798 = vsub.f32 %v748, %v773
    %v799 = vsub.f32 %v749, %v774
    %v800 = vsub.f32 %v750, %v775
    %v801 = vsub.f32 %v751, %v776
    %v802 = vsub.f32 %v752, %v777
    %v803 = vsub.f32 %v753, %v778
    %v804 = vmax.f32 %v779, 0.0
    %v805 = vmax.f32 %v780, 0.0
    %v806 = vmax.f32 %v781, 0.0
    %v807 = vmax.f32 %v782, 0.0
    %v808 = vmax.f32 %v783, 0.0
    %v809 = vmax.f32 %v784, 0.0
    %v810 = vmax.f32 %v785, 0.0
    %v811 = vmax.f32 %v786, 0.0
    %v812 = vmax.f32 %v787, 0.0
    %v813 = vmax.f32 %v788, 0.0
    %v814 = vmax.f32 %v789, 0.0
    %v815 = vmax.f32 %v790, 0.0
    %v816 = vmax.f32 %v791, 0.0
    %v817 = vmax.f32 %v792, 0.0
    %v818 = vmax.f32 %v793, 0.0
    %v819 = vmax.f32 %v794, 0.0
    %v820 = vmax.f32 %v795, 0.0
    %v821 = vmax.f32 %v796, 0.0
    %v822 = vmax.f32 %v797, 0.0
    %v823 = vmax.f32 %v798, 0.0
    %v824 = vmax.f32 %v799, 0.0
    %v825 = vmax.f32 %v800, 0.0
    %v826 = vmax.f32 %v801, 0.0
    %v827 = vmax.f32 %v802, 0.0
    %v828 = vmax.f32 %v803, 0.0
    %v829 = vadd.f32 %v804, 1e-06
    %v830 = vadd.f32 %v805, 1e-06
    %v831 = vadd.f32 %v806, 1e-06
    %v832 = vadd.f32 %v807, 1e-06
    %v833 = vadd.f32 %v808, 1e-06
    %v834 = vadd.f32 %v809, 1e-06
    %v835 = vadd.f32 %v810, 1e-06
    %v836 = vadd.f32 %v811, 1e-06
    %v837 = vadd.f32 %v812, 1e-06
    %v838 = vadd.f32 %v813, 1e-06
    %v839 = vadd.f32 %v814, 1e-06
    %v840 = vadd.f32 %v815, 1e-06
    %v841 = vadd.f32 %v816, 1e-06
    %v842 = vadd.f32 %v817, 1e-06
    %v843 = vadd.f32 %v818, 1e-06
    %v844 = vadd.f32 %v819, 1e-06
    %v845 = vadd.f32 %v820, 1e-06
    %v846 = vadd.f32 %v821, 1e-06
    %v847 = vadd.f32 %v822, 1e-06
    %v848 = vadd.f32 %v823, 1e-06
    %v849 = vadd.f32 %v824, 1e-06
    %v850 = vadd.f32 %v825, 1e-06
    %v851 = vadd.f32 %v826, 1e-06
    %v852 = vadd.f32 %v827, 1e-06
    %v853 = vadd.f32 %v828, 1e-06
    %v854 = vrsqrt.pop %v829
    %v855 = vrsqrt.pop %v830
    %v856 = vrsqrt.pop %v831
    %v857 = vrsqrt.pop %v832
    %v858 = vrsqrt.pop %v833
    %v859 = vrsqrt.pop %v834
    %v860 = vrsqrt.pop %v835
    %v861 = vrsqrt.pop %v836
    %v862 = vrsqrt.pop %v837
    %v863 = vrsqrt.pop %v838
    %v864 = vrsqrt.pop %v839
    %v865 = vrsqrt.pop %v840
    %v866 = vrsqrt.pop %v841
    %v867 = vrsqrt.pop %v842
    %v868 = vrsqrt.pop %v843
    %v869 = vrsqrt.pop %v844
    %v870 = vrsqrt.pop %v845
    %v871 = vrsqrt.pop %v846
    %v872 = vrsqrt.pop %v847
    %v873 = vrsqrt.pop %v848
    %v874 = vrsqrt.pop %v849
    %v875 = vrsqrt.pop %v850
    %v876 = vrsqrt.pop %v851
    %v877 = vrsqrt.pop %v852
    %v878 = vrsqrt.pop %v853
    %v879 = vsub.f32 %v41, %v704
    %v880 = vsub.f32 %v42, %v704
    %v881 = vsub.f32 %v43, %v704
    %v882 = vsub.f32 %v44, %v704
    %v883 = vsub.f32 %v45, %v704
    %v884 = vsub.f32 %v46, %v704
    %v885 = vsub.f32 %v47, %v705
    %v886 = vsub.f32 %v48, %v705
    %v887 = vsub.f32 %v49, %v705
    %v888 = vsub.f32 %v50, %v705
    %v889 = vsub.f32 %v51, %v705
    %v890 = vsub.f32 %v52, %v705
    %v891 = vsub.f32 %v53, %v706
    %v892 = vsub.f32 %v54, %v706
    %v893 = vsub.f32 %v55, %v706
    %v894 = vsub.f32 %v56, %v706
    %v895 = vsub.f32 %v57, %v706
    %v896 = vsub.f32 %v58, %v706
    %v897 = vsub.f32 %v59, %v707
    %v898 = vsub.f32 %v60, %v707
    %v899 = vsub.f32 %v61, %v707
    %v900 = vsub.f32 %v62, %v707
    %v901 = vsub.f32 %v63, %v707
    %v902 = vsub.f32 %v64, %v707
    %v903 = vsub.f32 %v65, %v708
    %v904 = vsub.f32 %v66, %v708
    %v905 = vsub.f32 %v67, %v708
    %v906 = vsub.f32 %v68, %v708
    %v907 = vsub.f32 %v69, %v708
    %v908 = vsub.f32 %v70, %v708
    %v909 = vsub.f32 %v71, %v709
    %v910 = vsub.f32 %v72, %v709
    %v911 = vsub.f32 %v73, %v709
    %v912 = vsub.f32 %v74, %v709
    %v913 = vsub.f32 %v75, %v709
    %v914 = vsub.f32 %v76, %v709
    %v915 = vsub.f32 %v77, %v710
    %v916 = vsub.f32 %v78, %v710
    %v917 = vsub.f32 %v79, %v710
    %v918 = vsub.f32 %v80, %v710
    %v919 = vsub.f32 %v81, %v710
    %v920 = vsub.f32 %v82, %v710
    %v921 = vsub.f32 %v83, %v711
    %v922 = vsub.f32 %v84, %v711
    %v923 = vsub.f32 %v85, %v711
    %v924 = vsub.f32 %v86, %v711
    %v925 = vsub.f32 %v87, %v711
    %v926 = vsub.f32 %v88, %v711
    %v927 = vsub.f32 %v89, %v712
    %v928 = vsub.f32 %v90, %v712
    %v929 = vsub.f32 %v91, %v712
    %v930 = vsub.f32 %v92, %v712
    %v931 = vsub.f32 %v93, %v712
    %v932 = vsub.f32 %v94, %v712
    %v933 = vsub.f32 %v95, %v713
    %v934 = vsub.f32 %v96, %v713
    %v935 = vsub.f32 %v97, %v713
    %v936 = vsub.f32 %v98, %v713
    %v937 = vsub.f32 %v99, %v713
    %v938 = vsub.f32 %v100, %v713
    %v939 = vsub.f32 %v101, %v714
    %v940 = vsub.f32 %v102, %v714
    %v941 = vsub.f32 %v103, %v714
    %v942 = vsub.f32 %v104, %v714
    %v943 = vsub.f32 %v105, %v714
    %v944 = vsub.f32 %v106, %v714
    %v945 = vsub.f32 %v107, %v715
    %v946 = vsub.f32 %v108, %v715
    %v947 = vsub.f32 %v109, %v715
    %v948 = vsub.f32 %v110, %v715
    %v949 = vsub.f32 %v111, %v715
    %v950 = vsub.f32 %v112, %v715
    %v951 = vsub.f32 %v113, %v716
    %v952 = vsub.f32 %v114, %v716
    %v953 = vsub.f32 %v115, %v716
    %v954 = vsub.f32 %v116, %v716
    %v955 = vsub.f32 %v117, %v716
    %v956 = vsub.f32 %v118, %v716
    %v957 = vsub.f32 %v119, %v717
    %v958 = vsub.f32 %v120, %v717
    %v959 = vsub.f32 %v121, %v717
    %v960 = vsub.f32 %v122, %v717
    %v961 = vsub.f32 %v123, %v717
    %v962 = vsub.f32 %v124, %v717
    %v963 = vsub.f32 %v125, %v718
    %v964 = vsub.f32 %v126, %v718
    %v965 = vsub.f32 %v127, %v718
    %v966 = vsub.f32 %v128, %v718
    %v967 = vsub.f32 %v129, %v718
    %v968 = vsub.f32 %v130, %v718
    %v969 = vsub.f32 %v131, %v719
    %v970 = vsub.f32 %v132, %v719
    %v971 = vsub.f32 %v133, %v719
    %v972 = vsub.f32 %v134, %v719
    %v973 = vsub.f32 %v135, %v719
    %v974 = vsub.f32 %v136, %v719
    %v975 = vsub.f32 %v137, %v720
    %v976 = vsub.f32 %v138, %v720
    %v977 = vsub.f32 %v139, %v720
    %v978 = vsub.f32 %v140, %v720
    %v979 = vsub.f32 %v141, %v720
    %v980 = vsub.f32 %v142, %v720
    %v981 = vsub.f32 %v143, %v721
    %v982 = vsub.f32 %v144, %v721
    %v983 = vsub.f32 %v145, %v721
    %v984 = vsub.f32 %v146, %v721
    %v985 = vsub.f32 %v147, %v721
    %v986 = vsub.f32 %v148, %v721
    %v987 = vsub.f32 %v149, %v722
    %v988 = vsub.f32 %v150, %v722
    %v989 = vsub.f32 %v151, %v722
    %v990 = vsub.f32 %v152, %v722
    %v991 = vsub.f32 %v153, %v722
    %v992 = vsub.f32 %v154, %v722
    %v993 = vsub.f32 %v155, %v723
    %v994 = vsub.f32 %v156, %v723
    %v995 = vsub.f32 %v157, %v723
    %v996 = vsub.f32 %v158, %v723
    %v997 = vsub.f32 %v159, %v723
    %v998 = vsub.f32 %v160, %v723
    %v999 = vsub.f32 %v161, %v724
    %v1000 = vsub.f32 %v162, %v724
    %v1001 = vsub.f32 %v163, %v724
    %v1002 = vsub.f32 %v164, %v724
    %v1003 = vsub.f32 %v165, %v724
    %v1004 = vsub.f32 %v166, %v724
    %v1005 = vsub.f32 %v167, %v725
    %v1006 = vsub.f32 %v168, %v725
    %v1007 = vsub.f32 %v169, %v725
    %v1008 = vsub.f32 %v170, %v725
    %v1009 = vsub.f32 %v171, %v725
    %v1010 = vsub.f32 %v172, %v725
    %v1011 = vsub.f32 %v173, %v726
    %v1012 = vsub.f32 %v174, %v726
    %v1013 = vsub.f32 %v175, %v726
    %v1014 = vsub.f32 %v176, %v726
    %v1015 = vsub.f32 %v177, %v726
    %v1016 = vsub.f32 %v178, %v726
    %v1017 = vsub.f32 %v179, %v727
    %v1018 = vsub.f32 %v180, %v727
    %v1019 = vsub.f32 %v181, %v727
    %v1020 = vsub.f32 %v182, %v727
    %v1021 = vsub.f32 %v183, %v727
    %v1022 = vsub.f32 %v184, %v727
    %v1023 = vsub.f32 %v185, %v728
    %v1024 = vsub.f32 %v186, %v728
    %v1025 = vsub.f32 %v187, %v728
    %v1026 = vsub.f32 %v188, %v728
    %v1027 = vsub.f32 %v189, %v728
    %v1028 = vsub.f32 %v190, %v728
    %v1029 = vmul.f32 %v879, %v854
    %v1030 = vmul.f32 %v880, %v854
    %v1031 = vmul.f32 %v881, %v854
    %v1032 = vmul.f32 %v882, %v854
    %v1033 = vmul.f32 %v883, %v854
    %v1034 = vmul.f32 %v884, %v854
    %v1035 = vmul.f32 %v885, %v855
    %v1036 = vmul.f32 %v886, %v855
    %v1037 = vmul.f32 %v887, %v855
    %v1038 = vmul.f32 %v888, %v855
    %v1039 = vmul.f32 %v889, %v855
    %v1040 = vmul.f32 %v890, %v855
    %v1041 = vmul.f32 %v891, %v856
    %v1042 = vmul.f32 %v892, %v856
    %v1043 = vmul.f32 %v893, %v856
    %v1044 = vmul.f32 %v894, %v856
    %v1045 = vmul.f32 %v895, %v856
    %v1046 = vmul.f32 %v896, %v856
    %v1047 = vmul.f32 %v897, %v857
    %v1048 = vmul.f32 %v898, %v857
    %v1049 = vmul.f32 %v899, %v857
    %v1050 = vmul.f32 %v900, %v857
    %v1051 = vmul.f32 %v901, %v857
    %v1052 = vmul.f32 %v902, %v857
    %v1053 = vmul.f32 %v903, %v858
    %v1054 = vmul.f32 %v904, %v858
    %v1055 = vmul.f32 %v905, %v858
    %v1056 = vmul.f32 %v906, %v858
    %v1057 = vmul.f32 %v907, %v858
    %v1058 = vmul.f32 %v908, %v858
    %v1059 = vmul.f32 %v909, %v859
    %v1060 = vmul.f32 %v910, %v859
    %v1061 = vmul.f32 %v911, %v859
    %v1062 = vmul.f32 %v912, %v859
    %v1063 = vmul.f32 %v913, %v859
    %v1064 = vmul.f32 %v914, %v859
    %v1065 = vmul.f32 %v915, %v860
    %v1066 = vmul.f32 %v916, %v860
    %v1067 = vmul.f32 %v917, %v860
    %v1068 = vmul.f32 %v918, %v860
    %v1069 = vmul.f32 %v919, %v860
    %v1070 = vmul.f32 %v920, %v860
    %v1071 = vmul.f32 %v921, %v861
    %v1072 = vmul.f32 %v922, %v861
    %v1073 = vmul.f32 %v923, %v861
    %v1074 = vmul.f32 %v924, %v861
    %v1075 = vmul.f32 %v925, %v861
    %v1076 = vmul.f32 %v926, %v861
    %v1077 = vmul.f32 %v927, %v862
    %v1078 = vmul.f32 %v928, %v862
    %v1079 = vmul.f32 %v929, %v862
    %v1080 = vmul.f32 %v930, %v862
    %v1081 = vmul.f32 %v931, %v862
    %v1082 = vmul.f32 %v932, %v862
    %v1083 = vmul.f32 %v933, %v863
    %v1084 = vmul.f32 %v934, %v863
    %v1085 = vmul.f32 %v935, %v863
    %v1086 = vmul.f32 %v936, %v863
    %v1087 = vmul.f32 %v937, %v863
    %v1088 = vmul.f32 %v938, %v863
    %v1089 = vmul.f32 %v939, %v864
    %v1090 = vmul.f32 %v940, %v864
    %v1091 = vmul.f32 %v941, %v864
    %v1092 = vmul.f32 %v942, %v864
    %v1093 = vmul.f32 %v943, %v864
    %v1094 = vmul.f32 %v944, %v864
    %v1095 = vmul.f32 %v945, %v865
    %v1096 = vmul.f32 %v946, %v865
    %v1097 = vmul.f32 %v947, %v865
    %v1098 = vmul.f32 %v948, %v865
    %v1099 = vmul.f32 %v949, %v865
    %v1100 = vmul.f32 %v950, %v865
    %v1101 = vmul.f32 %v951, %v866
    %v1102 = vmul.f32 %v952, %v866
    %v1103 = vmul.f32 %v953, %v866
    %v1104 = vmul.f32 %v954, %v866
    %v1105 = vmul.f32 %v955, %v866
    %v1106 = vmul.f32 %v956, %v866
    %v1107 = vmul.f32 %v957, %v867
    %v1108 = vmul.f32 %v958, %v867
    %v1109 = vmul.f32 %v959, %v867
    %v1110 = vmul.f32 %v960, %v867
    %v1111 = vmul.f32 %v961, %v867
    %v1112 = vmul.f32 %v962, %v867
    %v1113 = vmul.f32 %v963, %v868
    %v1114 = vmul.f32 %v964, %v868
    %v1115 = vmul.f32 %v965, %v868
    %v1116 = vmul.f32 %v966, %v868
    %v1117 = vmul.f32 %v967, %v868
    %v1118 = vmul.f32 %v968, %v868
    %v1119 = vmul.f32 %v969, %v869
    %v1120 = vmul.f32 %v970, %v869
    %v1121 = vmul.f32 %v971, %v869
    %v1122 = vmul.f32 %v972, %v869
    %v1123 = vmul.f32 %v973, %v869
    %v1124 = vmul.f32 %v974, %v869
    %v1125 = vmul.f32 %v975, %v870
    %v1126 = vmul.f32 %v976, %v870
    %v1127 = vmul.f32 %v977, %v870
    %v1128 = vmul.f32 %v978, %v870
    %v1129 = vmul.f32 %v979, %v870
    %v1130 = vmul.f32 %v980, %v870
    %v1131 = vmul.f32 %v981, %v871
    %v1132 = vmul.f32 %v982, %v871
    %v1133 = vmul.f32 %v983, %v871
    %v1134 = vmul.f32 %v984, %v871
    %v1135 = vmul.f32 %v985, %v871
    %v1136 = vmul.f32 %v986, %v871
    %v1137 = vmul.f32 %v987, %v872
    %v1138 = vmul.f32 %v988, %v872
    %v1139 = vmul.f32 %v989, %v872
    %v1140 = vmul.f32 %v990, %v872
    %v1141 = vmul.f32 %v991, %v872
    %v1142 = vmul.f32 %v992, %v872
    %v1143 = vmul.f32 %v993, %v873
    %v1144 = vmul.f32 %v994, %v873
    %v1145 = vmul.f32 %v995, %v873
    %v1146 = vmul.f32 %v996, %v873
    %v1147 = vmul.f32 %v997, %v873
    %v1148 = vmul.f32 %v998, %v873
    %v1149 = vmul.f32 %v999, %v874
    %v1150 = vmul.f32 %v1000, %v874
    %v1151 = vmul.f32 %v1001, %v874
    %v1152 = vmul.f32 %v1002, %v874
    %v1153 = vmul.f32 %v1003, %v874
    %v1154 = vmul.f32 %v1004, %v874
    %v1155 = vmul.f32 %v1005, %v875
    %v1156 = vmul.f32 %v1006, %v875
    %v1157 = vmul.f32 %v1007, %v875
    %v1158 = vmul.f32 %v1008, %v875
    %v1159 = vmul.f32 %v1009, %v875
    %v1160 = vmul.f32 %v1010, %v875
    %v1161 = vmul.f32 %v1011, %v876
    %v1162 = vmul.f32 %v1012, %v876
    %v1163 = vmul.f32 %v1013, %v876
    %v1164 = vmul.f32 %v1014, %v876
    %v1165 = vmul.f32 %v1015, %v876
    %v1166 = vmul.f32 %v1016, %v876
    %v1167 = vmul.f32 %v1017, %v877
    %v1168 = vmul.f32 %v1018, %v877
    %v1169 = vmul.f32 %v1019, %v877
    %v1170 = vmul.f32 %v1020, %v877
    %v1171 = vmul.f32 %v1021, %v877
    %v1172 = vmul.f32 %v1022, %v877
    %v1173 = vmul.f32 %v1023, %v878
    %v1174 = vmul.f32 %v1024, %v878
    %v1175 = vmul.f32 %v1025, %v878
    %v1176 = vmul.f32 %v1026, %v878
    %v1177 = vmul.f32 %v1027, %v878
    %v1178 = vmul.f32 %v1028, %v878
    %v1179 = vld [vmem:[#allocation5] sm:$0x3f]
    %v1181 = vlaneseq
    %v1182 = vshrl.u32 %v1181, 7
    %v1183 = vsub.s32 0, %v1182
    %v1184 = vrot.slane %v1179, %v1183
    %v1185 = vlaneseq
    %v1186 = vshrl.u32 %v1185, 7
    %v1187 = vsub.s32 1, %v1186
    %v1188 = vrot.slane %v1179, %v1187
    %v1189 = vlaneseq
    %v1190 = vshrl.u32 %v1189, 7
    %v1191 = vsub.s32 2, %v1190
    %v1192 = vrot.slane %v1179, %v1191
    %v1193 = vlaneseq
    %v1194 = vshrl.u32 %v1193, 7
    %v1195 = vsub.s32 3, %v1194
    %v1196 = vrot.slane %v1179, %v1195
    %v1197 = vlaneseq
    %v1198 = vshrl.u32 %v1197, 7
    %v1199 = vsub.s32 4, %v1198
    %v1200 = vrot.slane %v1179, %v1199
    %v1201 = vlaneseq
    %v1202 = vshrl.u32 %v1201, 7
    %v1203 = vsub.s32 5, %v1202
    %v1204 = vrot.slane %v1179, %v1203
    %v1211 = vmul.f32 %v1029, %v1184
    %v1212 = vmul.f32 %v1030, %v1188
    %v1213 = vmul.f32 %v1031, %v1192
    %v1214 = vmul.f32 %v1032, %v1196
    %v1215 = vmul.f32 %v1033, %v1200
    %v1216 = vmul.f32 %v1034, %v1204
    %v1217 = vmul.f32 %v1035, %v1184
    %v1218 = vmul.f32 %v1036, %v1188
    %v1219 = vmul.f32 %v1037, %v1192
    %v1220 = vmul.f32 %v1038, %v1196
    %v1221 = vmul.f32 %v1039, %v1200
    %v1222 = vmul.f32 %v1040, %v1204
    %v1223 = vmul.f32 %v1041, %v1184
    %v1224 = vmul.f32 %v1042, %v1188
    %v1225 = vmul.f32 %v1043, %v1192
    %v1226 = vmul.f32 %v1044, %v1196
    %v1227 = vmul.f32 %v1045, %v1200
    %v1228 = vmul.f32 %v1046, %v1204
    %v1229 = vmul.f32 %v1047, %v1184
    %v1230 = vmul.f32 %v1048, %v1188
    %v1231 = vmul.f32 %v1049, %v1192
    %v1232 = vmul.f32 %v1050, %v1196
    %v1233 = vmul.f32 %v1051, %v1200
    %v1234 = vmul.f32 %v1052, %v1204
    %v1235 = vmul.f32 %v1053, %v1184
    %v1236 = vmul.f32 %v1054, %v1188
    %v1237 = vmul.f32 %v1055, %v1192
    %v1238 = vmul.f32 %v1056, %v1196
    %v1239 = vmul.f32 %v1057, %v1200
    %v1240 = vmul.f32 %v1058, %v1204
    %v1241 = vmul.f32 %v1059, %v1184
    %v1242 = vmul.f32 %v1060, %v1188
    %v1243 = vmul.f32 %v1061, %v1192
    %v1244 = vmul.f32 %v1062, %v1196
    %v1245 = vmul.f32 %v1063, %v1200
    %v1246 = vmul.f32 %v1064, %v1204
    %v1247 = vmul.f32 %v1065, %v1184
    %v1248 = vmul.f32 %v1066, %v1188
    %v1249 = vmul.f32 %v1067, %v1192
    %v1250 = vmul.f32 %v1068, %v1196
    %v1251 = vmul.f32 %v1069, %v1200
    %v1252 = vmul.f32 %v1070, %v1204
    %v1253 = vmul.f32 %v1071, %v1184
    %v1254 = vmul.f32 %v1072, %v1188
    %v1255 = vmul.f32 %v1073, %v1192
    %v1256 = vmul.f32 %v1074, %v1196
    %v1257 = vmul.f32 %v1075, %v1200
    %v1258 = vmul.f32 %v1076, %v1204
    %v1259 = vmul.f32 %v1077, %v1184
    %v1260 = vmul.f32 %v1078, %v1188
    %v1261 = vmul.f32 %v1079, %v1192
    %v1262 = vmul.f32 %v1080, %v1196
    %v1263 = vmul.f32 %v1081, %v1200
    %v1264 = vmul.f32 %v1082, %v1204
    %v1265 = vmul.f32 %v1083, %v1184
    %v1266 = vmul.f32 %v1084, %v1188
    %v1267 = vmul.f32 %v1085, %v1192
    %v1268 = vmul.f32 %v1086, %v1196
    %v1269 = vmul.f32 %v1087, %v1200
    %v1270 = vmul.f32 %v1088, %v1204
    %v1271 = vmul.f32 %v1089, %v1184
    %v1272 = vmul.f32 %v1090, %v1188
    %v1273 = vmul.f32 %v1091, %v1192
    %v1274 = vmul.f32 %v1092, %v1196
    %v1275 = vmul.f32 %v1093, %v1200
    %v1276 = vmul.f32 %v1094, %v1204
    %v1277 = vmul.f32 %v1095, %v1184
    %v1278 = vmul.f32 %v1096, %v1188
    %v1279 = vmul.f32 %v1097, %v1192
    %v1280 = vmul.f32 %v1098, %v1196
    %v1281 = vmul.f32 %v1099, %v1200
    %v1282 = vmul.f32 %v1100, %v1204
    %v1283 = vmul.f32 %v1101, %v1184
    %v1284 = vmul.f32 %v1102, %v1188
    %v1285 = vmul.f32 %v1103, %v1192
    %v1286 = vmul.f32 %v1104, %v1196
    %v1287 = vmul.f32 %v1105, %v1200
    %v1288 = vmul.f32 %v1106, %v1204
    %v1289 = vmul.f32 %v1107, %v1184
    %v1290 = vmul.f32 %v1108, %v1188
    %v1291 = vmul.f32 %v1109, %v1192
    %v1292 = vmul.f32 %v1110, %v1196
    %v1293 = vmul.f32 %v1111, %v1200
    %v1294 = vmul.f32 %v1112, %v1204
    %v1295 = vmul.f32 %v1113, %v1184
    %v1296 = vmul.f32 %v1114, %v1188
    %v1297 = vmul.f32 %v1115, %v1192
    %v1298 = vmul.f32 %v1116, %v1196
    %v1299 = vmul.f32 %v1117, %v1200
    %v1300 = vmul.f32 %v1118, %v1204
    %v1301 = vmul.f32 %v1119, %v1184
    %v1302 = vmul.f32 %v1120, %v1188
    %v1303 = vmul.f32 %v1121, %v1192
    %v1304 = vmul.f32 %v1122, %v1196
    %v1305 = vmul.f32 %v1123, %v1200
    %v1306 = vmul.f32 %v1124, %v1204
    %v1307 = vmul.f32 %v1125, %v1184
    %v1308 = vmul.f32 %v1126, %v1188
    %v1309 = vmul.f32 %v1127, %v1192
    %v1310 = vmul.f32 %v1128, %v1196
    %v1311 = vmul.f32 %v1129, %v1200
    %v1312 = vmul.f32 %v1130, %v1204
    %v1313 = vmul.f32 %v1131, %v1184
    %v1314 = vmul.f32 %v1132, %v1188
    %v1315 = vmul.f32 %v1133, %v1192
    %v1316 = vmul.f32 %v1134, %v1196
    %v1317 = vmul.f32 %v1135, %v1200
    %v1318 = vmul.f32 %v1136, %v1204
    %v1319 = vmul.f32 %v1137, %v1184
    %v1320 = vmul.f32 %v1138, %v1188
    %v1321 = vmul.f32 %v1139, %v1192
    %v1322 = vmul.f32 %v1140, %v1196
    %v1323 = vmul.f32 %v1141, %v1200
    %v1324 = vmul.f32 %v1142, %v1204
    %v1325 = vmul.f32 %v1143, %v1184
    %v1326 = vmul.f32 %v1144, %v1188
    %v1327 = vmul.f32 %v1145, %v1192
    %v1328 = vmul.f32 %v1146, %v1196
    %v1329 = vmul.f32 %v1147, %v1200
    %v1330 = vmul.f32 %v1148, %v1204
    %v1331 = vmul.f32 %v1149, %v1184
    %v1332 = vmul.f32 %v1150, %v1188
    %v1333 = vmul.f32 %v1151, %v1192
    %v1334 = vmul.f32 %v1152, %v1196
    %v1335 = vmul.f32 %v1153, %v1200
    %v1336 = vmul.f32 %v1154, %v1204
    %v1337 = vmul.f32 %v1155, %v1184
    %v1338 = vmul.f32 %v1156, %v1188
    %v1339 = vmul.f32 %v1157, %v1192
    %v1340 = vmul.f32 %v1158, %v1196
    %v1341 = vmul.f32 %v1159, %v1200
    %v1342 = vmul.f32 %v1160, %v1204
    %v1343 = vmul.f32 %v1161, %v1184
    %v1344 = vmul.f32 %v1162, %v1188
    %v1345 = vmul.f32 %v1163, %v1192
    %v1346 = vmul.f32 %v1164, %v1196
    %v1347 = vmul.f32 %v1165, %v1200
    %v1348 = vmul.f32 %v1166, %v1204
    %v1349 = vmul.f32 %v1167, %v1184
    %v1350 = vmul.f32 %v1168, %v1188
    %v1351 = vmul.f32 %v1169, %v1192
    %v1352 = vmul.f32 %v1170, %v1196
    %v1353 = vmul.f32 %v1171, %v1200
    %v1354 = vmul.f32 %v1172, %v1204
    %v1355 = vmul.f32 %v1173, %v1184
    %v1356 = vmul.f32 %v1174, %v1188
    %v1357 = vmul.f32 %v1175, %v1192
    %v1358 = vmul.f32 %v1176, %v1196
    %v1359 = vmul.f32 %v1177, %v1200
    %v1360 = vmul.f32 %v1178, %v1204
    %v1361 = vld [vmem:[%s2] sm:$0x3f]
    %v1363 = vlaneseq
    %v1364 = vshrl.u32 %v1363, 7
    %v1365 = vsub.s32 0, %v1364
    %v1366 = vrot.slane %v1361, %v1365
    %v1367 = vlaneseq
    %v1368 = vshrl.u32 %v1367, 7
    %v1369 = vsub.s32 1, %v1368
    %v1370 = vrot.slane %v1361, %v1369
    %v1371 = vlaneseq
    %v1372 = vshrl.u32 %v1371, 7
    %v1373 = vsub.s32 2, %v1372
    %v1374 = vrot.slane %v1361, %v1373
    %v1375 = vlaneseq
    %v1376 = vshrl.u32 %v1375, 7
    %v1377 = vsub.s32 3, %v1376
    %v1378 = vrot.slane %v1361, %v1377
    %v1379 = vlaneseq
    %v1380 = vshrl.u32 %v1379, 7
    %v1381 = vsub.s32 4, %v1380
    %v1382 = vrot.slane %v1361, %v1381
    %v1383 = vlaneseq
    %v1384 = vshrl.u32 %v1383, 7
    %v1385 = vsub.s32 5, %v1384
    %v1386 = vrot.slane %v1361, %v1385
    %v1393 = vadd.f32 %v1211, %v1366
    %v1394 = vadd.f32 %v1212, %v1370
    %v1395 = vadd.f32 %v1213, %v1374
    %v1396 = vadd.f32 %v1214, %v1378
    %v1397 = vadd.f32 %v1215, %v1382
    %v1398 = vadd.f32 %v1216, %v1386
    %v1399 = vadd.f32 %v1217, %v1366
    %v1400 = vadd.f32 %v1218, %v1370
    %v1401 = vadd.f32 %v1219, %v1374
    %v1402 = vadd.f32 %v1220, %v1378
    %v1403 = vadd.f32 %v1221, %v1382
    %v1404 = vadd.f32 %v1222, %v1386
    %v1405 = vadd.f32 %v1223, %v1366
    %v1406 = vadd.f32 %v1224, %v1370
    %v1407 = vadd.f32 %v1225, %v1374
    %v1408 = vadd.f32 %v1226, %v1378
    %v1409 = vadd.f32 %v1227, %v1382
    %v1410 = vadd.f32 %v1228, %v1386
    %v1411 = vadd.f32 %v1229, %v1366
    %v1412 = vadd.f32 %v1230, %v1370
    %v1413 = vadd.f32 %v1231, %v1374
    %v1414 = vadd.f32 %v1232, %v1378
    %v1415 = vadd.f32 %v1233, %v1382
    %v1416 = vadd.f32 %v1234, %v1386
    %v1417 = vadd.f32 %v1235, %v1366
    %v1418 = vadd.f32 %v1236, %v1370
    %v1419 = vadd.f32 %v1237, %v1374
    %v1420 = vadd.f32 %v1238, %v1378
    %v1421 = vadd.f32 %v1239, %v1382
    %v1422 = vadd.f32 %v1240, %v1386
    %v1423 = vadd.f32 %v1241, %v1366
    %v1424 = vadd.f32 %v1242, %v1370
    %v1425 = vadd.f32 %v1243, %v1374
    %v1426 = vadd.f32 %v1244, %v1378
    %v1427 = vadd.f32 %v1245, %v1382
    %v1428 = vadd.f32 %v1246, %v1386
    %v1429 = vadd.f32 %v1247, %v1366
    %v1430 = vadd.f32 %v1248, %v1370
    %v1431 = vadd.f32 %v1249, %v1374
    %v1432 = vadd.f32 %v1250, %v1378
    %v1433 = vadd.f32 %v1251, %v1382
    %v1434 = vadd.f32 %v1252, %v1386
    %v1435 = vadd.f32 %v1253, %v1366
    %v1436 = vadd.f32 %v1254, %v1370
    %v1437 = vadd.f32 %v1255, %v1374
    %v1438 = vadd.f32 %v1256, %v1378
    %v1439 = vadd.f32 %v1257, %v1382
    %v1440 = vadd.f32 %v1258, %v1386
    %v1441 = vadd.f32 %v1259, %v1366
    %v1442 = vadd.f32 %v1260, %v1370
    %v1443 = vadd.f32 %v1261, %v1374
    %v1444 = vadd.f32 %v1262, %v1378
    %v1445 = vadd.f32 %v1263, %v1382
    %v1446 = vadd.f32 %v1264, %v1386
    %v1447 = vadd.f32 %v1265, %v1366
    %v1448 = vadd.f32 %v1266, %v1370
    %v1449 = vadd.f32 %v1267, %v1374
    %v1450 = vadd.f32 %v1268, %v1378
    %v1451 = vadd.f32 %v1269, %v1382
    %v1452 = vadd.f32 %v1270, %v1386
    %v1453 = vadd.f32 %v1271, %v1366
    %v1454 = vadd.f32 %v1272, %v1370
    %v1455 = vadd.f32 %v1273, %v1374
    %v1456 = vadd.f32 %v1274, %v1378
    %v1457 = vadd.f32 %v1275, %v1382
    %v1458 = vadd.f32 %v1276, %v1386
    %v1459 = vadd.f32 %v1277, %v1366
    %v1460 = vadd.f32 %v1278, %v1370
    %v1461 = vadd.f32 %v1279, %v1374
    %v1462 = vadd.f32 %v1280, %v1378
    %v1463 = vadd.f32 %v1281, %v1382
    %v1464 = vadd.f32 %v1282, %v1386
    %v1465 = vadd.f32 %v1283, %v1366
    %v1466 = vadd.f32 %v1284, %v1370
    %v1467 = vadd.f32 %v1285, %v1374
    %v1468 = vadd.f32 %v1286, %v1378
    %v1469 = vadd.f32 %v1287, %v1382
    %v1470 = vadd.f32 %v1288, %v1386
    %v1471 = vadd.f32 %v1289, %v1366
    %v1472 = vadd.f32 %v1290, %v1370
    %v1473 = vadd.f32 %v1291, %v1374
    %v1474 = vadd.f32 %v1292, %v1378
    %v1475 = vadd.f32 %v1293, %v1382
    %v1476 = vadd.f32 %v1294, %v1386
    %v1477 = vadd.f32 %v1295, %v1366
    %v1478 = vadd.f32 %v1296, %v1370
    %v1479 = vadd.f32 %v1297, %v1374
    %v1480 = vadd.f32 %v1298, %v1378
    %v1481 = vadd.f32 %v1299, %v1382
    %v1482 = vadd.f32 %v1300, %v1386
    %v1483 = vadd.f32 %v1301, %v1366
    %v1484 = vadd.f32 %v1302, %v1370
    %v1485 = vadd.f32 %v1303, %v1374
    %v1486 = vadd.f32 %v1304, %v1378
    %v1487 = vadd.f32 %v1305, %v1382
    %v1488 = vadd.f32 %v1306, %v1386
    %v1489 = vadd.f32 %v1307, %v1366
    %v1490 = vadd.f32 %v1308, %v1370
    %v1491 = vadd.f32 %v1309, %v1374
    %v1492 = vadd.f32 %v1310, %v1378
    %v1493 = vadd.f32 %v1311, %v1382
    %v1494 = vadd.f32 %v1312, %v1386
    %v1495 = vadd.f32 %v1313, %v1366
    %v1496 = vadd.f32 %v1314, %v1370
    %v1497 = vadd.f32 %v1315, %v1374
    %v1498 = vadd.f32 %v1316, %v1378
    %v1499 = vadd.f32 %v1317, %v1382
    %v1500 = vadd.f32 %v1318, %v1386
    %v1501 = vadd.f32 %v1319, %v1366
    %v1502 = vadd.f32 %v1320, %v1370
    %v1503 = vadd.f32 %v1321, %v1374
    %v1504 = vadd.f32 %v1322, %v1378
    %v1505 = vadd.f32 %v1323, %v1382
    %v1506 = vadd.f32 %v1324, %v1386
    %v1507 = vadd.f32 %v1325, %v1366
    %v1508 = vadd.f32 %v1326, %v1370
    %v1509 = vadd.f32 %v1327, %v1374
    %v1510 = vadd.f32 %v1328, %v1378
    %v1511 = vadd.f32 %v1329, %v1382
    %v1512 = vadd.f32 %v1330, %v1386
    %v1513 = vadd.f32 %v1331, %v1366
    %v1514 = vadd.f32 %v1332, %v1370
    %v1515 = vadd.f32 %v1333, %v1374
    %v1516 = vadd.f32 %v1334, %v1378
    %v1517 = vadd.f32 %v1335, %v1382
    %v1518 = vadd.f32 %v1336, %v1386
    %v1519 = vadd.f32 %v1337, %v1366
    %v1520 = vadd.f32 %v1338, %v1370
    %v1521 = vadd.f32 %v1339, %v1374
    %v1522 = vadd.f32 %v1340, %v1378
    %v1523 = vadd.f32 %v1341, %v1382
    %v1524 = vadd.f32 %v1342, %v1386
    %v1525 = vadd.f32 %v1343, %v1366
    %v1526 = vadd.f32 %v1344, %v1370
    %v1527 = vadd.f32 %v1345, %v1374
    %v1528 = vadd.f32 %v1346, %v1378
    %v1529 = vadd.f32 %v1347, %v1382
    %v1530 = vadd.f32 %v1348, %v1386
    %v1531 = vadd.f32 %v1349, %v1366
    %v1532 = vadd.f32 %v1350, %v1370
    %v1533 = vadd.f32 %v1351, %v1374
    %v1534 = vadd.f32 %v1352, %v1378
    %v1535 = vadd.f32 %v1353, %v1382
    %v1536 = vadd.f32 %v1354, %v1386
    %v1537 = vadd.f32 %v1355, %v1366
    %v1538 = vadd.f32 %v1356, %v1370
    %v1539 = vadd.f32 %v1357, %v1374
    %v1540 = vadd.f32 %v1358, %v1378
    %v1541 = vadd.f32 %v1359, %v1382
    %v1542 = vadd.f32 %v1360, %v1386
    %1543 = vst [vmem:[#allocation7] sm:$0xff] %v1393
    %1544 = vst [vmem:[#allocation7 + $0x8] sm:$0xff] %v1394
    %1545 = vst [vmem:[#allocation7 + $0x10] sm:$0xff] %v1395
    %1546 = vst [vmem:[#allocation7 + $0x18] sm:$0xff] %v1396
    %1547 = vst [vmem:[#allocation7 + $0x20] sm:$0xff] %v1397
    %1548 = vst [vmem:[#allocation7 + $0x28] sm:$0xff] %v1398
    %1549 = vst [vmem:[#allocation7 + $0x30] sm:$0xff] %v1399
    %1550 = vst [vmem:[#allocation7 + $0x38] sm:$0xff] %v1400
    %1551 = vst [vmem:[#allocation7 + $0x40] sm:$0xff] %v1401
    %1552 = vst [vmem:[#allocation7 + $0x48] sm:$0xff] %v1402
    %1553 = vst [vmem:[#allocation7 + $0x50] sm:$0xff] %v1403
    %1554 = vst [vmem:[#allocation7 + $0x58] sm:$0xff] %v1404
    %1555 = vst [vmem:[#allocation7 + $0x60] sm:$0xff] %v1405
    %1556 = vst [vmem:[#allocation7 + $0x68] sm:$0xff] %v1406
    %1557 = vst [vmem:[#allocation7 + $0x70] sm:$0xff] %v1407
    %1558 = vst [vmem:[#allocation7 + $0x78] sm:$0xff] %v1408
    %1559 = vst [vmem:[#allocation7 + $0x80] sm:$0xff] %v1409
    %1560 = vst [vmem:[#allocation7 + $0x88] sm:$0xff] %v1410
    %1561 = vst [vmem:[#allocation7 + $0x90] sm:$0xff] %v1411
    %1562 = vst [vmem:[#allocation7 + $0x98] sm:$0xff] %v1412
    %1563 = vst [vmem:[#allocation7 + $0xa0] sm:$0xff] %v1413
    %1564 = vst [vmem:[#allocation7 + $0xa8] sm:$0xff] %v1414
    %1565 = vst [vmem:[#allocation7 + $0xb0] sm:$0xff] %v1415
    %1566 = vst [vmem:[#allocation7 + $0xb8] sm:$0xff] %v1416
    %1567 = vst [vmem:[#allocation7 + $0xc0] sm:$0xff] %v1417
    %1568 = vst [vmem:[#allocation7 + $0xc8] sm:$0xff] %v1418
    %1569 = vst [vmem:[#allocation7 + $0xd0] sm:$0xff] %v1419
    %1570 = vst [vmem:[#allocation7 + $0xd8] sm:$0xff] %v1420
    %1571 = vst [vmem:[#allocation7 + $0xe0] sm:$0xff] %v1421
    %1572 = vst [vmem:[#allocation7 + $0xe8] sm:$0xff] %v1422
    %1573 = vst [vmem:[#allocation7 + $0xf0] sm:$0xff] %v1423
    %1574 = vst [vmem:[#allocation7 + $0xf8] sm:$0xff] %v1424
    %1575 = vst [vmem:[#allocation7 + $0x100] sm:$0xff] %v1425
    %1576 = vst [vmem:[#allocation7 + $0x108] sm:$0xff] %v1426
    %1577 = vst [vmem:[#allocation7 + $0x110] sm:$0xff] %v1427
    %1578 = vst [vmem:[#allocation7 + $0x118] sm:$0xff] %v1428
    %1579 = vst [vmem:[#allocation7 + $0x120] sm:$0xff] %v1429
    %1580 = vst [vmem:[#allocation7 + $0x128] sm:$0xff] %v1430
    %1581 = vst [vmem:[#allocation7 + $0x130] sm:$0xff] %v1431
    %1582 = vst [vmem:[#allocation7 + $0x138] sm:$0xff] %v1432
    %1583 = vst [vmem:[#allocation7 + $0x140] sm:$0xff] %v1433
    %1584 = vst [vmem:[#allocation7 + $0x148] sm:$0xff] %v1434
    %1585 = vst [vmem:[#allocation7 + $0x150] sm:$0xff] %v1435
    %1586 = vst [vmem:[#allocation7 + $0x158] sm:$0xff] %v1436
    %1587 = vst [vmem:[#allocation7 + $0x160] sm:$0xff] %v1437
    %1588 = vst [vmem:[#allocation7 + $0x168] sm:$0xff] %v1438
    %1589 = vst [vmem:[#allocation7 + $0x170] sm:$0xff] %v1439
    %1590 = vst [vmem:[#allocation7 + $0x178] sm:$0xff] %v1440
    %1591 = vst [vmem:[#allocation7 + $0x180] sm:$0xff] %v1441
    %1592 = vst [vmem:[#allocation7 + $0x188] sm:$0xff] %v1442
    %1593 = vst [vmem:[#allocation7 + $0x190] sm:$0xff] %v1443
    %1594 = vst [vmem:[#allocation7 + $0x198] sm:$0xff] %v1444
    %1595 = vst [vmem:[#allocation7 + $0x1a0] sm:$0xff] %v1445
    %1596 = vst [vmem:[#allocation7 + $0x1a8] sm:$0xff] %v1446
    %1597 = vst [vmem:[#allocation7 + $0x1b0] sm:$0xff] %v1447
    %1598 = vst [vmem:[#allocation7 + $0x1b8] sm:$0xff] %v1448
    %1599 = vst [vmem:[#allocation7 + $0x1c0] sm:$0xff] %v1449
    %1600 = vst [vmem:[#allocation7 + $0x1c8] sm:$0xff] %v1450
    %1601 = vst [vmem:[#allocation7 + $0x1d0] sm:$0xff] %v1451
    %1602 = vst [vmem:[#allocation7 + $0x1d8] sm:$0xff] %v1452
    %1603 = vst [vmem:[#allocation7 + $0x1e0] sm:$0xff] %v1453
    %1604 = vst [vmem:[#allocation7 + $0x1e8] sm:$0xff] %v1454
    %1605 = vst [vmem:[#allocation7 + $0x1f0] sm:$0xff] %v1455
    %1606 = vst [vmem:[#allocation7 + $0x1f8] sm:$0xff] %v1456
    %1607 = vst [vmem:[#allocation7 + $0x200] sm:$0xff] %v1457
    %1608 = vst [vmem:[#allocation7 + $0x208] sm:$0xff] %v1458
    %1609 = vst [vmem:[#allocation7 + $0x210] sm:$0xff] %v1459
    %1610 = vst [vmem:[#allocation7 + $0x218] sm:$0xff] %v1460
    %1611 = vst [vmem:[#allocation7 + $0x220] sm:$0xff] %v1461
    %1612 = vst [vmem:[#allocation7 + $0x228] sm:$0xff] %v1462
    %1613 = vst [vmem:[#allocation7 + $0x230] sm:$0xff] %v1463
    %1614 = vst [vmem:[#allocation7 + $0x238] sm:$0xff] %v1464
    %1615 = vst [vmem:[#allocation7 + $0x240] sm:$0xff] %v1465
    %1616 = vst [vmem:[#allocation7 + $0x248] sm:$0xff] %v1466
    %1617 = vst [vmem:[#allocation7 + $0x250] sm:$0xff] %v1467
    %1618 = vst [vmem:[#allocation7 + $0x258] sm:$0xff] %v1468
    %1619 = vst [vmem:[#allocation7 + $0x260] sm:$0xff] %v1469
    %1620 = vst [vmem:[#allocation7 + $0x268] sm:$0xff] %v1470
    %1621 = vst [vmem:[#allocation7 + $0x270] sm:$0xff] %v1471
    %1622 = vst [vmem:[#allocation7 + $0x278] sm:$0xff] %v1472
    %1623 = vst [vmem:[#allocation7 + $0x280] sm:$0xff] %v1473
    %1624 = vst [vmem:[#allocation7 + $0x288] sm:$0xff] %v1474
    %1625 = vst [vmem:[#allocation7 + $0x290] sm:$0xff] %v1475
    %1626 = vst [vmem:[#allocation7 + $0x298] sm:$0xff] %v1476
    %1627 = vst [vmem:[#allocation7 + $0x2a0] sm:$0xff] %v1477
    %1628 = vst [vmem:[#allocation7 + $0x2a8] sm:$0xff] %v1478
    %1629 = vst [vmem:[#allocation7 + $0x2b0] sm:$0xff] %v1479
    %1630 = vst [vmem:[#allocation7 + $0x2b8] sm:$0xff] %v1480
    %1631 = vst [vmem:[#allocation7 + $0x2c0] sm:$0xff] %v1481
    %1632 = vst [vmem:[#allocation7 + $0x2c8] sm:$0xff] %v1482
    %1633 = vst [vmem:[#allocation7 + $0x2d0] sm:$0xff] %v1483
    %1634 = vst [vmem:[#allocation7 + $0x2d8] sm:$0xff] %v1484
    %1635 = vst [vmem:[#allocation7 + $0x2e0] sm:$0xff] %v1485
    %1636 = vst [vmem:[#allocation7 + $0x2e8] sm:$0xff] %v1486
    %1637 = vst [vmem:[#allocation7 + $0x2f0] sm:$0xff] %v1487
    %1638 = vst [vmem:[#allocation7 + $0x2f8] sm:$0xff] %v1488
    %1639 = vst [vmem:[#allocation7 + $0x300] sm:$0xff] %v1489
    %1640 = vst [vmem:[#allocation7 + $0x308] sm:$0xff] %v1490
    %1641 = vst [vmem:[#allocation7 + $0x310] sm:$0xff] %v1491
    %1642 = vst [vmem:[#allocation7 + $0x318] sm:$0xff] %v1492
    %1643 = vst [vmem:[#allocation7 + $0x320] sm:$0xff] %v1493
    %1644 = vst [vmem:[#allocation7 + $0x328] sm:$0xff] %v1494
    %1645 = vst [vmem:[#allocation7 + $0x330] sm:$0xff] %v1495
    %1646 = vst [vmem:[#allocation7 + $0x338] sm:$0xff] %v1496
    %1647 = vst [vmem:[#allocation7 + $0x340] sm:$0xff] %v1497
    %1648 = vst [vmem:[#allocation7 + $0x348] sm:$0xff] %v1498
    %1649 = vst [vmem:[#allocation7 + $0x350] sm:$0xff] %v1499
    %1650 = vst [vmem:[#allocation7 + $0x358] sm:$0xff] %v1500
    %1651 = vst [vmem:[#allocation7 + $0x360] sm:$0xff] %v1501
    %1652 = vst [vmem:[#allocation7 + $0x368] sm:$0xff] %v1502
    %1653 = vst [vmem:[#allocation7 + $0x370] sm:$0xff] %v1503
    %1654 = vst [vmem:[#allocation7 + $0x378] sm:$0xff] %v1504
    %1655 = vst [vmem:[#allocation7 + $0x380] sm:$0xff] %v1505
    %1656 = vst [vmem:[#allocation7 + $0x388] sm:$0xff] %v1506
    %1657 = vst [vmem:[#allocation7 + $0x390] sm:$0xff] %v1507
    %1658 = vst [vmem:[#allocation7 + $0x398] sm:$0xff] %v1508
    %1659 = vst [vmem:[#allocation7 + $0x3a0] sm:$0xff] %v1509
    %1660 = vst [vmem:[#allocation7 + $0x3a8] sm:$0xff] %v1510
    %1661 = vst [vmem:[#allocation7 + $0x3b0] sm:$0xff] %v1511
    %1662 = vst [vmem:[#allocation7 + $0x3b8] sm:$0xff] %v1512
    %1663 = vst [vmem:[#allocation7 + $0x3c0] sm:$0xff] %v1513
    %1664 = vst [vmem:[#allocation7 + $0x3c8] sm:$0xff] %v1514
    %1665 = vst [vmem:[#allocation7 + $0x3d0] sm:$0xff] %v1515
    %1666 = vst [vmem:[#allocation7 + $0x3d8] sm:$0xff] %v1516
    %1667 = vst [vmem:[#allocation7 + $0x3e0] sm:$0xff] %v1517
    %1668 = vst [vmem:[#allocation7 + $0x3e8] sm:$0xff] %v1518
    %1669 = vst [vmem:[#allocation7 + $0x3f0] sm:$0xff] %v1519
    %1670 = vst [vmem:[#allocation7 + $0x3f8] sm:$0xff] %v1520
    %1671 = vst [vmem:[#allocation7 + $0x400] sm:$0xff] %v1521
    %1672 = vst [vmem:[#allocation7 + $0x408] sm:$0xff] %v1522
    %1673 = vst [vmem:[#allocation7 + $0x410] sm:$0xff] %v1523
    %1674 = vst [vmem:[#allocation7 + $0x418] sm:$0xff] %v1524
    %1675 = vst [vmem:[#allocation7 + $0x420] sm:$0xff] %v1525
    %1676 = vst [vmem:[#allocation7 + $0x428] sm:$0xff] %v1526
    %1677 = vst [vmem:[#allocation7 + $0x430] sm:$0xff] %v1527
    %1678 = vst [vmem:[#allocation7 + $0x438] sm:$0xff] %v1528
    %1679 = vst [vmem:[#allocation7 + $0x440] sm:$0xff] %v1529
    %1680 = vst [vmem:[#allocation7 + $0x448] sm:$0xff] %v1530
    %1681 = vst [vmem:[#allocation7 + $0x450] sm:$0xff] %v1531
    %1682 = vst [vmem:[#allocation7 + $0x458] sm:$0xff] %v1532
    %1683 = vst [vmem:[#allocation7 + $0x460] sm:$0xff] %v1533
    %1684 = vst [vmem:[#allocation7 + $0x468] sm:$0xff] %v1534
    %1685 = vst [vmem:[#allocation7 + $0x470] sm:$0xff] %v1535
    %1686 = vst [vmem:[#allocation7 + $0x478] sm:$0xff] %v1536
    %1687 = vst [vmem:[#allocation7 + $0x480] sm:$0xf] %v1537
    %1688 = vst [vmem:[#allocation7 + $0x488] sm:$0xf] %v1538
    %1689 = vst [vmem:[#allocation7 + $0x490] sm:$0xf] %v1539
    %1690 = vst [vmem:[#allocation7 + $0x498] sm:$0xf] %v1540
    %1691 = vst [vmem:[#allocation7 + $0x4a0] sm:$0xf] %v1541
    %1692 = vst [vmem:[#allocation7 + $0x4a8] sm:$0xf] %v1542
    // Predicated region
    $region22: #{tpu_custom_call.1} parent=1 // pred_check
      _
    $region23: #{tpu_custom_call.1} parent=1 // pred_check_branch
      %1694 = sbr.rel (0) target = $region25
    $region24: #{tpu_custom_call.1} parent=1 // pred_region
      %s1696 = ssub.s32 19200, 19200
      %1697 = vsyncadd [#allocation4], %s1696
      %s1698 = sshll.u32 [#allocation7], 4
      %s1699 = int_to_ptr.vmem [resolvable:$true] %s1698
      %1704 = dma.vmem_to_hbm [thread:$0]  %s1699, 19200, %s3, [#allocation4], 768, 768, 48
    $region25: #{tpu_custom_call.1} parent=1 // pred_fallthru
      _
    // Predicated region
    $region26: #{tpu_custom_call.1} parent=1 // pred_check
      _
    $region27: #{tpu_custom_call.1} parent=1 // pred_check_branch
      %1706 = sbr.rel (0) target = $region29
    $region28: #{tpu_custom_call.1} parent=1 // pred_region
      %1707 = dma.done [#allocation4], 19200
    $region29: #{tpu_custom_call.1} parent=1 // pred_fallthru
      _
    %1708 = vsyncpa [#allocation3], 1
    %1709 = vsyncpa [#allocation6], 1
    %1710 = vsyncpa [#allocation4], 1

</llo_original>
